<compile_context>
chip_gen: v6e
topology: v6e:2x2x1
jax: 0.10.0
libtpu: 0.0.40
codegen_flags: <defaults>
</compile_context>

<pallas_src>
import functools

import jax
import jax.numpy as jnp
from jax import lax
from jax.experimental import pallas as pl
from jax.experimental.pallas import tpu as pltpu

KSIZE = 7
PAD = 3
NTAPS = KSIZE * KSIZE


def _round_up(x, m):
    return ((x + m - 1) // m) * m


def sam_kernel(H, W, LPAD, w_ref, b_ref, cmask_ref, x_ref, out_ref,
               pad_a, pad_m):
    """One batch element per grid step, fully lane-dense.

    w_ref     : (98,) f32 SMEM   flattened OIHW conv weight (c, ki, kj)
    b_ref     : (1,)  f32 SMEM   conv bias
    cmask_ref : (8, H*W) f32 VMEM  row kj = output-column validity, dj = kj-3
    x_ref     : (1, C, H*W) VMEM lane-dense input block
    out_ref   : (1, C, H*W) VMEM lane-dense output block
    pad_a/pad_m : (1, LPAD + H*W + LPAD) f32 VMEM zero-padded flat planes
    """
    HW = H * W

    # ---- channel reductions, lane-dense (f32 accumulation, no f32 x-copy) ---
    x_blk = x_ref[0]                                             # (C, HW)
    avg_flat = jnp.mean(x_blk, axis=0, keepdims=True, dtype=jnp.float32)
    max_flat = jnp.max(x_blk, axis=0, keepdims=True).astype(jnp.float32)

    # ---- refresh zero borders + aligned interior stores ---------------------
    # (done every step: megacore-safe when the batch axis is split across TCs)
    zpad = jnp.zeros((1, LPAD), jnp.float32)
    pad_a[:, 0:LPAD] = zpad
    pad_a[:, LPAD + HW:2 * LPAD + HW] = zpad
    pad_m[:, 0:LPAD] = zpad
    pad_m[:, LPAD + HW:2 * LPAD + HW] = zpad
    pad_a[:, LPAD:LPAD + HW] = avg_flat
    pad_m[:, LPAD:LPAD + HW] = max_flat

    # ---- 7x7 conv in the flat lane-dense domain ------------------------------
    # Tap (ki, kj) for output p = h*W + w reads flat source p + (ki-3)*W + (kj-3).
    # Row overflow lands in the zero borders; invalid column wrap is masked by
    # the per-kj output-column mask.  4 accumulators break the 98-tap chain.
    accs = [jnp.zeros((1, HW), jnp.float32) for _ in range(4)]
    t = 0
    for kj in range(KSIZE):
        dj = kj - PAD
        cm = cmask_ref[kj:kj + 1, :]                             # (1, HW)
        for ki in range(KSIZE):
            off = LPAD + (ki - PAD) * W + dj
            sa = pad_a[:, off:off + HW]
            sm = pad_m[:, off:off + HW]
            w_a = w_ref[ki * KSIZE + kj]
            w_m = w_ref[NTAPS + ki * KSIZE + kj]
            accs[t % 4] = accs[t % 4] + cm * (w_a * sa + w_m * sm)
            t += 1

    logits = (accs[0] + accs[1]) + (accs[2] + accs[3]) + b_ref[0]
    att = jax.nn.sigmoid(logits)                                 # (1, HW) f32

    # ---- lane-dense bulk multiply + store (native dtype) ---------------------
    out_ref[0] = (x_ref[0] * att.astype(out_ref.dtype)).astype(out_ref.dtype)


def sam_forward(x, conv_w, conv_b):
    """x: (N, C, H, W); conv_w: (1, 2, 7, 7); conv_b: (1,)"""
    N, C, H, W = x.shape
    HW = H * W
    # Left/right zero border for the flat padded planes: >= 3*W + 3, rounded
    # up to a lane multiple so interior stores stay aligned.
    LPAD = _round_up(PAD * W + PAD, 128)

    # Lane-dense bulk layout.  (HW is a multiple of 128 here; for odd sizes one
    # would zero-pad HW up to the next multiple of 128 in this wrapper.)
    x_flat = x.reshape(N, C, HW)
    w_flat = conv_w.reshape(-1).astype(jnp.float32)              # (98,)
    b = conv_b.astype(jnp.float32)                               # (1,)

    # Output-column validity masks, one row per kernel column kj (dj = kj - 3).
    col = jnp.arange(HW, dtype=jnp.int32) % W
    mask_rows = []
    for kj in range(KSIZE):
        dj = kj - PAD
        ok = jnp.logical_and(col + dj >= 0, col + dj < W)
        mask_rows.append(ok.astype(jnp.float32))
    mask_rows.append(jnp.zeros((HW,), jnp.float32))              # pad to 8 rows
    cmask = jnp.stack(mask_rows, axis=0)                         # (8, HW)

    kernel = functools.partial(sam_kernel, H, W, LPAD)

    itemsize = x.dtype.itemsize
    block_bytes = C * HW * itemsize
    vmem_needed = (4 * block_bytes                 # in + out, double-buffered
                   + 2 * 8 * HW * 4                # resident column masks
                   + 2 * (2 * LPAD + HW) * 4)      # padded-plane scratch
    vmem_limit = int(min(max(vmem_needed + (4 << 20), 16 << 20), 64 << 20))

    cost = pl.CostEstimate(
        flops=N * HW * (3 * C + 6 * NTAPS + 8),
        transcendentals=N * HW,
        bytes_accessed=2 * N * C * HW * itemsize + 8 * HW * 4 + 99 * 4)

    out_flat = pl.pallas_call(
        kernel,
        out_shape=jax.ShapeDtypeStruct((N, C, HW), x.dtype),
        grid_spec=pltpu.PrefetchScalarGridSpec(
            num_scalar_prefetch=0,
            grid=(N,),
            in_specs=[
                pl.BlockSpec(memory_space=pltpu.MemorySpace.SMEM),    # weights
                pl.BlockSpec(memory_space=pltpu.MemorySpace.SMEM),    # bias
                pl.BlockSpec((8, HW), lambda n: (0, 0)),              # col masks
                pl.BlockSpec((1, C, HW), lambda n: (n, 0, 0)),        # x
            ],
            out_specs=pl.BlockSpec((1, C, HW), lambda n: (n, 0, 0)),
            scratch_shapes=[
                pltpu.VMEM((1, 2 * LPAD + HW), jnp.float32),          # avg plane
                pltpu.VMEM((1, 2 * LPAD + HW), jnp.float32),          # max plane
            ],
        ),
        compiler_params=pltpu.CompilerParams(
            dimension_semantics=("parallel",),
            vmem_limit_bytes=vmem_limit),
        input_output_aliases={3: 0},                                  # x -> out
        cost_estimate=cost,
    )(w_flat, b, cmask, x_flat)

    return out_flat.reshape(N, C, H, W)


def sam_reference(x, conv_w, conv_b):
    """Plain-JAX reference matching the PyTorch forward."""
    avg = jnp.mean(x, axis=1, keepdims=True)
    mx = jnp.max(x, axis=1, keepdims=True)
    att_in = jnp.concatenate([avg, mx], axis=1)                  # (N, 2, H, W)
    att = lax.conv_general_dilated(
        att_in, conv_w, window_strides=(1, 1),
        padding=((PAD, PAD), (PAD, PAD)),
        dimension_numbers=("NCHW", "OIHW", "NCHW")) + conv_b[None, :, None, None]
    att = jax.nn.sigmoid(att)
    return x * att


if __name__ == "__main__":
    key = jax.random.PRNGKey(0)
    k_x, k_w, k_b = jax.random.split(key, 3)

    N, C, H, W = 2, 4, 16, 16
    x = jax.random.normal(k_x, (N, C, H, W), dtype=jnp.float32)

    # Deterministic synthetic Conv2d(2, 1, 7, padding=3) parameters.
    fan_in = 2 * KSIZE * KSIZE
    bound = 1.0 / (fan_in ** 0.5)
    conv_w = jax.random.uniform(k_w, (1, 2, KSIZE, KSIZE),
                                minval=-bound, maxval=bound, dtype=jnp.float32)
    conv_b = jax.random.uniform(k_b, (1,), minval=-bound, maxval=bound,
                                dtype=jnp.float32)

    out = sam_forward(x, conv_w, conv_b)
    out = jax.block_until_ready(out)

    ref = sam_reference(x, conv_w, conv_b)
    assert out.shape == (N, C, H, W)
    assert jnp.allclose(out, ref, atol=1e-5, rtol=1e-5), "mismatch vs reference"

    print("KERNEL_OK")
</pallas_src>

<mosaic_0001>
module attributes {stable_mosaic.version = 11 : i64} {
  func.func @sam_kernel(%arg0: i32, %arg1: memref<98xf32, #tpu.memory_space<smem>>, %arg2: memref<1xf32, #tpu.memory_space<smem>>, %arg3: memref<8x256xf32, #tpu.memory_space<vmem>>, %arg4: memref<1x4x256xf32, #tpu.memory_space<vmem>>, %arg5: memref<1x4x256xf32, #tpu.memory_space<vmem>>, %arg6: memref<1x512xf32, #tpu.memory_space<vmem>>, %arg7: memref<1x512xf32, #tpu.memory_space<vmem>>) attributes {dimension_semantics = [#tpu.dimension_semantics<parallel>], iteration_bounds = array<i64: 2>, scalar_prefetch = 0 : i64, scratch_operands = 2 : i64, tpu.core_type = #tpu.core_type<tc>, window_params = [{transform_indices = @transform_0, window_bounds = array<i64: 98>}, {transform_indices = @transform_1, window_bounds = array<i64: 1>}, {pipeline_mode = #tpu.pipeline_mode<synchronous>, transform_indices = @transform_2, window_bounds = array<i64: 8, 256>}, {transform_indices = @transform_3, window_bounds = array<i64: 1, 4, 256>}, {transform_indices = @transform_4, window_bounds = array<i64: 1, 4, 256>}]} {
    %c0 = arith.constant 0 : index
    %c0_0 = arith.constant 0 : index
    %c0_1 = arith.constant 0 : index
    %0 = vector.load %arg4[%c0, %c0_0, %c0_1] : memref<1x4x256xf32, #tpu.memory_space<vmem>>, vector<1x4x256xf32>
    %1 = vector.shape_cast %0 : vector<1x4x256xf32> to vector<4x256xf32>
    %cst = arith.constant dense<0.000000e+00> : vector<256xf32>
    %2 = vector.multi_reduction <add>, %1, %cst [0] : vector<4x256xf32> to vector<256xf32>
    %3 = vector.shape_cast %2 : vector<256xf32> to vector<1x256xf32>
    %cst_2 = arith.constant 4.000000e+00 : f32
    %4 = vector.broadcast %cst_2 : f32 to vector<1x256xf32>
    %5 = arith.divf %3, %4 : vector<1x256xf32>
    %cst_3 = arith.constant dense<0xFF800000> : vector<256xf32>
    %6 = vector.multi_reduction <maximumf>, %1, %cst_3 [0] : vector<4x256xf32> to vector<256xf32>
    %7 = vector.shape_cast %6 : vector<256xf32> to vector<1x256xf32>
    %cst_4 = arith.constant 0.000000e+00 : f32
    %8 = vector.broadcast %cst_4 : f32 to vector<1x128xf32>
    %c0_5 = arith.constant 0 : index
    %c0_6 = arith.constant 0 : index
    %9 = vector.load %arg6[%c0_5, %c0_6] : memref<1x512xf32, #tpu.memory_space<vmem>>, vector<1x128xf32>
    tpu.vector_store %arg6[%c0_5, %c0_6], %8 {strides = array<i32>} : memref<1x512xf32, #tpu.memory_space<vmem>>, vector<1x128xf32>,
    %c0_7 = arith.constant 0 : index
    %c384 = arith.constant 384 : index
    %10 = vector.load %arg6[%c0_7, %c384] : memref<1x512xf32, #tpu.memory_space<vmem>>, vector<1x128xf32>
    tpu.vector_store %arg6[%c0_7, %c384], %8 {strides = array<i32>} : memref<1x512xf32, #tpu.memory_space<vmem>>, vector<1x128xf32>,
    %c0_8 = arith.constant 0 : index
    %c0_9 = arith.constant 0 : index
    %11 = vector.load %arg7[%c0_8, %c0_9] : memref<1x512xf32, #tpu.memory_space<vmem>>, vector<1x128xf32>
    tpu.vector_store %arg7[%c0_8, %c0_9], %8 {strides = array<i32>} : memref<1x512xf32, #tpu.memory_space<vmem>>, vector<1x128xf32>,
    %c0_10 = arith.constant 0 : index
    %c384_11 = arith.constant 384 : index
    %12 = vector.load %arg7[%c0_10, %c384_11] : memref<1x512xf32, #tpu.memory_space<vmem>>, vector<1x128xf32>
    tpu.vector_store %arg7[%c0_10, %c384_11], %8 {strides = array<i32>} : memref<1x512xf32, #tpu.memory_space<vmem>>, vector<1x128xf32>,
    %c0_12 = arith.constant 0 : index
    %c128 = arith.constant 128 : index
    %13 = vector.load %arg6[%c0_12, %c128] : memref<1x512xf32, #tpu.memory_space<vmem>>, vector<1x256xf32>
    tpu.vector_store %arg6[%c0_12, %c128], %5 {strides = array<i32>} : memref<1x512xf32, #tpu.memory_space<vmem>>, vector<1x256xf32>,
    %c0_13 = arith.constant 0 : index
    %c128_14 = arith.constant 128 : index
    %14 = vector.load %arg7[%c0_13, %c128_14] : memref<1x512xf32, #tpu.memory_space<vmem>>, vector<1x256xf32>
    tpu.vector_store %arg7[%c0_13, %c128_14], %7 {strides = array<i32>} : memref<1x512xf32, #tpu.memory_space<vmem>>, vector<1x256xf32>,
    %cst_15 = arith.constant 0.000000e+00 : f32
    %15 = vector.broadcast %cst_15 : f32 to vector<1x256xf32>
    %cst_16 = arith.constant 0.000000e+00 : f32
    %16 = vector.broadcast %cst_16 : f32 to vector<1x256xf32>
    %cst_17 = arith.constant 0.000000e+00 : f32
    %17 = vector.broadcast %cst_17 : f32 to vector<1x256xf32>
    %cst_18 = arith.constant 0.000000e+00 : f32
    %18 = vector.broadcast %cst_18 : f32 to vector<1x256xf32>
    %c0_19 = arith.constant 0 : index
    %c0_20 = arith.constant 0 : index
    %19 = vector.load %arg3[%c0_19, %c0_20] : memref<8x256xf32, #tpu.memory_space<vmem>>, vector<1x256xf32>
    %c0_21 = arith.constant 0 : index
    %c77 = arith.constant 77 : index
    %20 = vector.load %arg6[%c0_21, %c77] : memref<1x512xf32, #tpu.memory_space<vmem>>, vector<1x256xf32>
    %c0_22 = arith.constant 0 : index
    %c77_23 = arith.constant 77 : index
    %21 = vector.load %arg7[%c0_22, %c77_23] : memref<1x512xf32, #tpu.memory_space<vmem>>, vector<1x256xf32>
    %c0_24 = arith.constant 0 : index
    %22 = memref.load %arg1[%c0_24] : memref<98xf32, #tpu.memory_space<smem>>
    %c49 = arith.constant 49 : index
    %23 = memref.load %arg1[%c49] : memref<98xf32, #tpu.memory_space<smem>>
    %24 = vector.broadcast %22 : f32 to vector<1x256xf32>
    %25 = arith.mulf %24, %20 : vector<1x256xf32>
    %26 = vector.broadcast %23 : f32 to vector<1x256xf32>
    %27 = arith.mulf %26, %21 : vector<1x256xf32>
    %28 = arith.addf %25, %27 : vector<1x256xf32>
    %29 = arith.mulf %19, %28 : vector<1x256xf32>
    %30 = arith.addf %15, %29 : vector<1x256xf32>
    %c0_25 = arith.constant 0 : index
    %c93 = arith.constant 93 : index
    %31 = vector.load %arg6[%c0_25, %c93] : memref<1x512xf32, #tpu.memory_space<vmem>>, vector<1x256xf32>
    %c0_26 = arith.constant 0 : index
    %c93_27 = arith.constant 93 : index
    %32 = vector.load %arg7[%c0_26, %c93_27] : memref<1x512xf32, #tpu.memory_space<vmem>>, vector<1x256xf32>
    %c7 = arith.constant 7 : index
    %33 = memref.load %arg1[%c7] : memref<98xf32, #tpu.memory_space<smem>>
    %c56 = arith.constant 56 : index
    %34 = memref.load %arg1[%c56] : memref<98xf32, #tpu.memory_space<smem>>
    %35 = vector.broadcast %33 : f32 to vector<1x256xf32>
    %36 = arith.mulf %35, %31 : vector<1x256xf32>
    %37 = vector.broadcast %34 : f32 to vector<1x256xf32>
    %38 = arith.mulf %37, %32 : vector<1x256xf32>
    %39 = arith.addf %36, %38 : vector<1x256xf32>
    %40 = arith.mulf %19, %39 : vector<1x256xf32>
    %41 = arith.addf %16, %40 : vector<1x256xf32>
    %c0_28 = arith.constant 0 : index
    %c109 = arith.constant 109 : index
    %42 = vector.load %arg6[%c0_28, %c109] : memref<1x512xf32, #tpu.memory_space<vmem>>, vector<1x256xf32>
    %c0_29 = arith.constant 0 : index
    %c109_30 = arith.constant 109 : index
    %43 = vector.load %arg7[%c0_29, %c109_30] : memref<1x512xf32, #tpu.memory_space<vmem>>, vector<1x256xf32>
    %c14 = arith.constant 14 : index
    %44 = memref.load %arg1[%c14] : memref<98xf32, #tpu.memory_space<smem>>
    %c63 = arith.constant 63 : index
    %45 = memref.load %arg1[%c63] : memref<98xf32, #tpu.memory_space<smem>>
    %46 = vector.broadcast %44 : f32 to vector<1x256xf32>
    %47 = arith.mulf %46, %42 : vector<1x256xf32>
    %48 = vector.broadcast %45 : f32 to vector<1x256xf32>
    %49 = arith.mulf %48, %43 : vector<1x256xf32>
    %50 = arith.addf %47, %49 : vector<1x256xf32>
    %51 = arith.mulf %19, %50 : vector<1x256xf32>
    %52 = arith.addf %17, %51 : vector<1x256xf32>
    %c0_31 = arith.constant 0 : index
    %c125 = arith.constant 125 : index
    %53 = vector.load %arg6[%c0_31, %c125] : memref<1x512xf32, #tpu.memory_space<vmem>>, vector<1x256xf32>
    %c0_32 = arith.constant 0 : index
    %c125_33 = arith.constant 125 : index
    %54 = vector.load %arg7[%c0_32, %c125_33] : memref<1x512xf32, #tpu.memory_space<vmem>>, vector<1x256xf32>
    %c21 = arith.constant 21 : index
    %55 = memref.load %arg1[%c21] : memref<98xf32, #tpu.memory_space<smem>>
    %c70 = arith.constant 70 : index
    %56 = memref.load %arg1[%c70] : memref<98xf32, #tpu.memory_space<smem>>
    %57 = vector.broadcast %55 : f32 to vector<1x256xf32>
    %58 = arith.mulf %57, %53 : vector<1x256xf32>
    %59 = vector.broadcast %56 : f32 to vector<1x256xf32>
    %60 = arith.mulf %59, %54 : vector<1x256xf32>
    %61 = arith.addf %58, %60 : vector<1x256xf32>
    %62 = arith.mulf %19, %61 : vector<1x256xf32>
    %63 = arith.addf %18, %62 : vector<1x256xf32>
    %c0_34 = arith.constant 0 : index
    %c141 = arith.constant 141 : index
    %64 = vector.load %arg6[%c0_34, %c141] : memref<1x512xf32, #tpu.memory_space<vmem>>, vector<1x256xf32>
    %c0_35 = arith.constant 0 : index
    %c141_36 = arith.constant 141 : index
    %65 = vector.load %arg7[%c0_35, %c141_36] : memref<1x512xf32, #tpu.memory_space<vmem>>, vector<1x256xf32>
    %c28 = arith.constant 28 : index
    %66 = memref.load %arg1[%c28] : memref<98xf32, #tpu.memory_space<smem>>
    %c77_37 = arith.constant 77 : index
    %67 = memref.load %arg1[%c77_37] : memref<98xf32, #tpu.memory_space<smem>>
    %68 = vector.broadcast %66 : f32 to vector<1x256xf32>
    %69 = arith.mulf %68, %64 : vector<1x256xf32>
    %70 = vector.broadcast %67 : f32 to vector<1x256xf32>
    %71 = arith.mulf %70, %65 : vector<1x256xf32>
    %72 = arith.addf %69, %71 : vector<1x256xf32>
    %73 = arith.mulf %19, %72 : vector<1x256xf32>
    %74 = arith.addf %30, %73 : vector<1x256xf32>
    %c0_38 = arith.constant 0 : index
    %c157 = arith.constant 157 : index
    %75 = vector.load %arg6[%c0_38, %c157] : memref<1x512xf32, #tpu.memory_space<vmem>>, vector<1x256xf32>
    %c0_39 = arith.constant 0 : index
    %c157_40 = arith.constant 157 : index
    %76 = vector.load %arg7[%c0_39, %c157_40] : memref<1x512xf32, #tpu.memory_space<vmem>>, vector<1x256xf32>
    %c35 = arith.constant 35 : index
    %77 = memref.load %arg1[%c35] : memref<98xf32, #tpu.memory_space<smem>>
    %c84 = arith.constant 84 : index
    %78 = memref.load %arg1[%c84] : memref<98xf32, #tpu.memory_space<smem>>
    %79 = vector.broadcast %77 : f32 to vector<1x256xf32>
    %80 = arith.mulf %79, %75 : vector<1x256xf32>
    %81 = vector.broadcast %78 : f32 to vector<1x256xf32>
    %82 = arith.mulf %81, %76 : vector<1x256xf32>
    %83 = arith.addf %80, %82 : vector<1x256xf32>
    %84 = arith.mulf %19, %83 : vector<1x256xf32>
    %85 = arith.addf %41, %84 : vector<1x256xf32>
    %c0_41 = arith.constant 0 : index
    %c173 = arith.constant 173 : index
    %86 = vector.load %arg6[%c0_41, %c173] : memref<1x512xf32, #tpu.memory_space<vmem>>, vector<1x256xf32>
    %c0_42 = arith.constant 0 : index
    %c173_43 = arith.constant 173 : index
    %87 = vector.load %arg7[%c0_42, %c173_43] : memref<1x512xf32, #tpu.memory_space<vmem>>, vector<1x256xf32>
    %c42 = arith.constant 42 : index
    %88 = memref.load %arg1[%c42] : memref<98xf32, #tpu.memory_space<smem>>
    %c91 = arith.constant 91 : index
    %89 = memref.load %arg1[%c91] : memref<98xf32, #tpu.memory_space<smem>>
    %90 = vector.broadcast %88 : f32 to vector<1x256xf32>
    %91 = arith.mulf %90, %86 : vector<1x256xf32>
    %92 = vector.broadcast %89 : f32 to vector<1x256xf32>
    %93 = arith.mulf %92, %87 : vector<1x256xf32>
    %94 = arith.addf %91, %93 : vector<1x256xf32>
    %95 = arith.mulf %19, %94 : vector<1x256xf32>
    %96 = arith.addf %52, %95 : vector<1x256xf32>
    %c1 = arith.constant 1 : index
    %c0_44 = arith.constant 0 : index
    %97 = vector.load %arg3[%c1, %c0_44] : memref<8x256xf32, #tpu.memory_space<vmem>>, vector<1x256xf32>
    %c0_45 = arith.constant 0 : index
    %c78 = arith.constant 78 : index
    %98 = vector.load %arg6[%c0_45, %c78] : memref<1x512xf32, #tpu.memory_space<vmem>>, vector<1x256xf32>
    %c0_46 = arith.constant 0 : index
    %c78_47 = arith.constant 78 : index
    %99 = vector.load %arg7[%c0_46, %c78_47] : memref<1x512xf32, #tpu.memory_space<vmem>>, vector<1x256xf32>
    %c1_48 = arith.constant 1 : index
    %100 = memref.load %arg1[%c1_48] : memref<98xf32, #tpu.memory_space<smem>>
    %c50 = arith.constant 50 : index
    %101 = memref.load %arg1[%c50] : memref<98xf32, #tpu.memory_space<smem>>
    %102 = vector.broadcast %100 : f32 to vector<1x256xf32>
    %103 = arith.mulf %102, %98 : vector<1x256xf32>
    %104 = vector.broadcast %101 : f32 to vector<1x256xf32>
    %105 = arith.mulf %104, %99 : vector<1x256xf32>
    %106 = arith.addf %103, %105 : vector<1x256xf32>
    %107 = arith.mulf %97, %106 : vector<1x256xf32>
    %108 = arith.addf %63, %107 : vector<1x256xf32>
    %c0_49 = arith.constant 0 : index
    %c94 = arith.constant 94 : index
    %109 = vector.load %arg6[%c0_49, %c94] : memref<1x512xf32, #tpu.memory_space<vmem>>, vector<1x256xf32>
    %c0_50 = arith.constant 0 : index
    %c94_51 = arith.constant 94 : index
    %110 = vector.load %arg7[%c0_50, %c94_51] : memref<1x512xf32, #tpu.memory_space<vmem>>, vector<1x256xf32>
    %c8 = arith.constant 8 : index
    %111 = memref.load %arg1[%c8] : memref<98xf32, #tpu.memory_space<smem>>
    %c57 = arith.constant 57 : index
    %112 = memref.load %arg1[%c57] : memref<98xf32, #tpu.memory_space<smem>>
    %113 = vector.broadcast %111 : f32 to vector<1x256xf32>
    %114 = arith.mulf %113, %109 : vector<1x256xf32>
    %115 = vector.broadcast %112 : f32 to vector<1x256xf32>
    %116 = arith.mulf %115, %110 : vector<1x256xf32>
    %117 = arith.addf %114, %116 : vector<1x256xf32>
    %118 = arith.mulf %97, %117 : vector<1x256xf32>
    %119 = arith.addf %74, %118 : vector<1x256xf32>
    %c0_52 = arith.constant 0 : index
    %c110 = arith.constant 110 : index
    %120 = vector.load %arg6[%c0_52, %c110] : memref<1x512xf32, #tpu.memory_space<vmem>>, vector<1x256xf32>
    %c0_53 = arith.constant 0 : index
    %c110_54 = arith.constant 110 : index
    %121 = vector.load %arg7[%c0_53, %c110_54] : memref<1x512xf32, #tpu.memory_space<vmem>>, vector<1x256xf32>
    %c15 = arith.constant 15 : index
    %122 = memref.load %arg1[%c15] : memref<98xf32, #tpu.memory_space<smem>>
    %c64 = arith.constant 64 : index
    %123 = memref.load %arg1[%c64] : memref<98xf32, #tpu.memory_space<smem>>
    %124 = vector.broadcast %122 : f32 to vector<1x256xf32>
    %125 = arith.mulf %124, %120 : vector<1x256xf32>
    %126 = vector.broadcast %123 : f32 to vector<1x256xf32>
    %127 = arith.mulf %126, %121 : vector<1x256xf32>
    %128 = arith.addf %125, %127 : vector<1x256xf32>
    %129 = arith.mulf %97, %128 : vector<1x256xf32>
    %130 = arith.addf %85, %129 : vector<1x256xf32>
    %c0_55 = arith.constant 0 : index
    %c126 = arith.constant 126 : index
    %131 = vector.load %arg6[%c0_55, %c126] : memref<1x512xf32, #tpu.memory_space<vmem>>, vector<1x256xf32>
    %c0_56 = arith.constant 0 : index
    %c126_57 = arith.constant 126 : index
    %132 = vector.load %arg7[%c0_56, %c126_57] : memref<1x512xf32, #tpu.memory_space<vmem>>, vector<1x256xf32>
    %c22 = arith.constant 22 : index
    %133 = memref.load %arg1[%c22] : memref<98xf32, #tpu.memory_space<smem>>
    %c71 = arith.constant 71 : index
    %134 = memref.load %arg1[%c71] : memref<98xf32, #tpu.memory_space<smem>>
    %135 = vector.broadcast %133 : f32 to vector<1x256xf32>
    %136 = arith.mulf %135, %131 : vector<1x256xf32>
    %137 = vector.broadcast %134 : f32 to vector<1x256xf32>
    %138 = arith.mulf %137, %132 : vector<1x256xf32>
    %139 = arith.addf %136, %138 : vector<1x256xf32>
    %140 = arith.mulf %97, %139 : vector<1x256xf32>
    %141 = arith.addf %96, %140 : vector<1x256xf32>
    %c0_58 = arith.constant 0 : index
    %c142 = arith.constant 142 : index
    %142 = vector.load %arg6[%c0_58, %c142] : memref<1x512xf32, #tpu.memory_space<vmem>>, vector<1x256xf32>
    %c0_59 = arith.constant 0 : index
    %c142_60 = arith.constant 142 : index
    %143 = vector.load %arg7[%c0_59, %c142_60] : memref<1x512xf32, #tpu.memory_space<vmem>>, vector<1x256xf32>
    %c29 = arith.constant 29 : index
    %144 = memref.load %arg1[%c29] : memref<98xf32, #tpu.memory_space<smem>>
    %c78_61 = arith.constant 78 : index
    %145 = memref.load %arg1[%c78_61] : memref<98xf32, #tpu.memory_space<smem>>
    %146 = vector.broadcast %144 : f32 to vector<1x256xf32>
    %147 = arith.mulf %146, %142 : vector<1x256xf32>
    %148 = vector.broadcast %145 : f32 to vector<1x256xf32>
    %149 = arith.mulf %148, %143 : vector<1x256xf32>
    %150 = arith.addf %147, %149 : vector<1x256xf32>
    %151 = arith.mulf %97, %150 : vector<1x256xf32>
    %152 = arith.addf %108, %151 : vector<1x256xf32>
    %c0_62 = arith.constant 0 : index
    %c158 = arith.constant 158 : index
    %153 = vector.load %arg6[%c0_62, %c158] : memref<1x512xf32, #tpu.memory_space<vmem>>, vector<1x256xf32>
    %c0_63 = arith.constant 0 : index
    %c158_64 = arith.constant 158 : index
    %154 = vector.load %arg7[%c0_63, %c158_64] : memref<1x512xf32, #tpu.memory_space<vmem>>, vector<1x256xf32>
    %c36 = arith.constant 36 : index
    %155 = memref.load %arg1[%c36] : memref<98xf32, #tpu.memory_space<smem>>
    %c85 = arith.constant 85 : index
    %156 = memref.load %arg1[%c85] : memref<98xf32, #tpu.memory_space<smem>>
    %157 = vector.broadcast %155 : f32 to vector<1x256xf32>
    %158 = arith.mulf %157, %153 : vector<1x256xf32>
    %159 = vector.broadcast %156 : f32 to vector<1x256xf32>
    %160 = arith.mulf %159, %154 : vector<1x256xf32>
    %161 = arith.addf %158, %160 : vector<1x256xf32>
    %162 = arith.mulf %97, %161 : vector<1x256xf32>
    %163 = arith.addf %119, %162 : vector<1x256xf32>
    %c0_65 = arith.constant 0 : index
    %c174 = arith.constant 174 : index
    %164 = vector.load %arg6[%c0_65, %c174] : memref<1x512xf32, #tpu.memory_space<vmem>>, vector<1x256xf32>
    %c0_66 = arith.constant 0 : index
    %c174_67 = arith.constant 174 : index
    %165 = vector.load %arg7[%c0_66, %c174_67] : memref<1x512xf32, #tpu.memory_space<vmem>>, vector<1x256xf32>
    %c43 = arith.constant 43 : index
    %166 = memref.load %arg1[%c43] : memref<98xf32, #tpu.memory_space<smem>>
    %c92 = arith.constant 92 : index
    %167 = memref.load %arg1[%c92] : memref<98xf32, #tpu.memory_space<smem>>
    %168 = vector.broadcast %166 : f32 to vector<1x256xf32>
    %169 = arith.mulf %168, %164 : vector<1x256xf32>
    %170 = vector.broadcast %167 : f32 to vector<1x256xf32>
    %171 = arith.mulf %170, %165 : vector<1x256xf32>
    %172 = arith.addf %169, %171 : vector<1x256xf32>
    %173 = arith.mulf %97, %172 : vector<1x256xf32>
    %174 = arith.addf %130, %173 : vector<1x256xf32>
    %c2 = arith.constant 2 : index
    %c0_68 = arith.constant 0 : index
    %175 = vector.load %arg3[%c2, %c0_68] : memref<8x256xf32, #tpu.memory_space<vmem>>, vector<1x256xf32>
    %c0_69 = arith.constant 0 : index
    %c79 = arith.constant 79 : index
    %176 = vector.load %arg6[%c0_69, %c79] : memref<1x512xf32, #tpu.memory_space<vmem>>, vector<1x256xf32>
    %c0_70 = arith.constant 0 : index
    %c79_71 = arith.constant 79 : index
    %177 = vector.load %arg7[%c0_70, %c79_71] : memref<1x512xf32, #tpu.memory_space<vmem>>, vector<1x256xf32>
    %c2_72 = arith.constant 2 : index
    %178 = memref.load %arg1[%c2_72] : memref<98xf32, #tpu.memory_space<smem>>
    %c51 = arith.constant 51 : index
    %179 = memref.load %arg1[%c51] : memref<98xf32, #tpu.memory_space<smem>>
    %180 = vector.broadcast %178 : f32 to vector<1x256xf32>
    %181 = arith.mulf %180, %176 : vector<1x256xf32>
    %182 = vector.broadcast %179 : f32 to vector<1x256xf32>
    %183 = arith.mulf %182, %177 : vector<1x256xf32>
    %184 = arith.addf %181, %183 : vector<1x256xf32>
    %185 = arith.mulf %175, %184 : vector<1x256xf32>
    %186 = arith.addf %141, %185 : vector<1x256xf32>
    %c0_73 = arith.constant 0 : index
    %c95 = arith.constant 95 : index
    %187 = vector.load %arg6[%c0_73, %c95] : memref<1x512xf32, #tpu.memory_space<vmem>>, vector<1x256xf32>
    %c0_74 = arith.constant 0 : index
    %c95_75 = arith.constant 95 : index
    %188 = vector.load %arg7[%c0_74, %c95_75] : memref<1x512xf32, #tpu.memory_space<vmem>>, vector<1x256xf32>
    %c9 = arith.constant 9 : index
    %189 = memref.load %arg1[%c9] : memref<98xf32, #tpu.memory_space<smem>>
    %c58 = arith.constant 58 : index
    %190 = memref.load %arg1[%c58] : memref<98xf32, #tpu.memory_space<smem>>
    %191 = vector.broadcast %189 : f32 to vector<1x256xf32>
    %192 = arith.mulf %191, %187 : vector<1x256xf32>
    %193 = vector.broadcast %190 : f32 to vector<1x256xf32>
    %194 = arith.mulf %193, %188 : vector<1x256xf32>
    %195 = arith.addf %192, %194 : vector<1x256xf32>
    %196 = arith.mulf %175, %195 : vector<1x256xf32>
    %197 = arith.addf %152, %196 : vector<1x256xf32>
    %c0_76 = arith.constant 0 : index
    %c111 = arith.constant 111 : index
    %198 = vector.load %arg6[%c0_76, %c111] : memref<1x512xf32, #tpu.memory_space<vmem>>, vector<1x256xf32>
    %c0_77 = arith.constant 0 : index
    %c111_78 = arith.constant 111 : index
    %199 = vector.load %arg7[%c0_77, %c111_78] : memref<1x512xf32, #tpu.memory_space<vmem>>, vector<1x256xf32>
    %c16 = arith.constant 16 : index
    %200 = memref.load %arg1[%c16] : memref<98xf32, #tpu.memory_space<smem>>
    %c65 = arith.constant 65 : index
    %201 = memref.load %arg1[%c65] : memref<98xf32, #tpu.memory_space<smem>>
    %202 = vector.broadcast %200 : f32 to vector<1x256xf32>
    %203 = arith.mulf %202, %198 : vector<1x256xf32>
    %204 = vector.broadcast %201 : f32 to vector<1x256xf32>
    %205 = arith.mulf %204, %199 : vector<1x256xf32>
    %206 = arith.addf %203, %205 : vector<1x256xf32>
    %207 = arith.mulf %175, %206 : vector<1x256xf32>
    %208 = arith.addf %163, %207 : vector<1x256xf32>
    %c0_79 = arith.constant 0 : index
    %c127 = arith.constant 127 : index
    %209 = vector.load %arg6[%c0_79, %c127] : memref<1x512xf32, #tpu.memory_space<vmem>>, vector<1x256xf32>
    %c0_80 = arith.constant 0 : index
    %c127_81 = arith.constant 127 : index
    %210 = vector.load %arg7[%c0_80, %c127_81] : memref<1x512xf32, #tpu.memory_space<vmem>>, vector<1x256xf32>
    %c23 = arith.constant 23 : index
    %211 = memref.load %arg1[%c23] : memref<98xf32, #tpu.memory_space<smem>>
    %c72 = arith.constant 72 : index
    %212 = memref.load %arg1[%c72] : memref<98xf32, #tpu.memory_space<smem>>
    %213 = vector.broadcast %211 : f32 to vector<1x256xf32>
    %214 = arith.mulf %213, %209 : vector<1x256xf32>
    %215 = vector.broadcast %212 : f32 to vector<1x256xf32>
    %216 = arith.mulf %215, %210 : vector<1x256xf32>
    %217 = arith.addf %214, %216 : vector<1x256xf32>
    %218 = arith.mulf %175, %217 : vector<1x256xf32>
    %219 = arith.addf %174, %218 : vector<1x256xf32>
    %c0_82 = arith.constant 0 : index
    %c143 = arith.constant 143 : index
    %220 = vector.load %arg6[%c0_82, %c143] : memref<1x512xf32, #tpu.memory_space<vmem>>, vector<1x256xf32>
    %c0_83 = arith.constant 0 : index
    %c143_84 = arith.constant 143 : index
    %221 = vector.load %arg7[%c0_83, %c143_84] : memref<1x512xf32, #tpu.memory_space<vmem>>, vector<1x256xf32>
    %c30 = arith.constant 30 : index
    %222 = memref.load %arg1[%c30] : memref<98xf32, #tpu.memory_space<smem>>
    %c79_85 = arith.constant 79 : index
    %223 = memref.load %arg1[%c79_85] : memref<98xf32, #tpu.memory_space<smem>>
    %224 = vector.broadcast %222 : f32 to vector<1x256xf32>
    %225 = arith.mulf %224, %220 : vector<1x256xf32>
    %226 = vector.broadcast %223 : f32 to vector<1x256xf32>
    %227 = arith.mulf %226, %221 : vector<1x256xf32>
    %228 = arith.addf %225, %227 : vector<1x256xf32>
    %229 = arith.mulf %175, %228 : vector<1x256xf32>
    %230 = arith.addf %186, %229 : vector<1x256xf32>
    %c0_86 = arith.constant 0 : index
    %c159 = arith.constant 159 : index
    %231 = vector.load %arg6[%c0_86, %c159] : memref<1x512xf32, #tpu.memory_space<vmem>>, vector<1x256xf32>
    %c0_87 = arith.constant 0 : index
    %c159_88 = arith.constant 159 : index
    %232 = vector.load %arg7[%c0_87, %c159_88] : memref<1x512xf32, #tpu.memory_space<vmem>>, vector<1x256xf32>
    %c37 = arith.constant 37 : index
    %233 = memref.load %arg1[%c37] : memref<98xf32, #tpu.memory_space<smem>>
    %c86 = arith.constant 86 : index
    %234 = memref.load %arg1[%c86] : memref<98xf32, #tpu.memory_space<smem>>
    %235 = vector.broadcast %233 : f32 to vector<1x256xf32>
    %236 = arith.mulf %235, %231 : vector<1x256xf32>
    %237 = vector.broadcast %234 : f32 to vector<1x256xf32>
    %238 = arith.mulf %237, %232 : vector<1x256xf32>
    %239 = arith.addf %236, %238 : vector<1x256xf32>
    %240 = arith.mulf %175, %239 : vector<1x256xf32>
    %241 = arith.addf %197, %240 : vector<1x256xf32>
    %c0_89 = arith.constant 0 : index
    %c175 = arith.constant 175 : index
    %242 = vector.load %arg6[%c0_89, %c175] : memref<1x512xf32, #tpu.memory_space<vmem>>, vector<1x256xf32>
    %c0_90 = arith.constant 0 : index
    %c175_91 = arith.constant 175 : index
    %243 = vector.load %arg7[%c0_90, %c175_91] : memref<1x512xf32, #tpu.memory_space<vmem>>, vector<1x256xf32>
    %c44 = arith.constant 44 : index
    %244 = memref.load %arg1[%c44] : memref<98xf32, #tpu.memory_space<smem>>
    %c93_92 = arith.constant 93 : index
    %245 = memref.load %arg1[%c93_92] : memref<98xf32, #tpu.memory_space<smem>>
    %246 = vector.broadcast %244 : f32 to vector<1x256xf32>
    %247 = arith.mulf %246, %242 : vector<1x256xf32>
    %248 = vector.broadcast %245 : f32 to vector<1x256xf32>
    %249 = arith.mulf %248, %243 : vector<1x256xf32>
    %250 = arith.addf %247, %249 : vector<1x256xf32>
    %251 = arith.mulf %175, %250 : vector<1x256xf32>
    %252 = arith.addf %208, %251 : vector<1x256xf32>
    %c3 = arith.constant 3 : index
    %c0_93 = arith.constant 0 : index
    %253 = vector.load %arg3[%c3, %c0_93] : memref<8x256xf32, #tpu.memory_space<vmem>>, vector<1x256xf32>
    %c0_94 = arith.constant 0 : index
    %c80 = arith.constant 80 : index
    %254 = vector.load %arg6[%c0_94, %c80] : memref<1x512xf32, #tpu.memory_space<vmem>>, vector<1x256xf32>
    %c0_95 = arith.constant 0 : index
    %c80_96 = arith.constant 80 : index
    %255 = vector.load %arg7[%c0_95, %c80_96] : memref<1x512xf32, #tpu.memory_space<vmem>>, vector<1x256xf32>
    %c3_97 = arith.constant 3 : index
    %256 = memref.load %arg1[%c3_97] : memref<98xf32, #tpu.memory_space<smem>>
    %c52 = arith.constant 52 : index
    %257 = memref.load %arg1[%c52] : memref<98xf32, #tpu.memory_space<smem>>
    %258 = vector.broadcast %256 : f32 to vector<1x256xf32>
    %259 = arith.mulf %258, %254 : vector<1x256xf32>
    %260 = vector.broadcast %257 : f32 to vector<1x256xf32>
    %261 = arith.mulf %260, %255 : vector<1x256xf32>
    %262 = arith.addf %259, %261 : vector<1x256xf32>
    %263 = arith.mulf %253, %262 : vector<1x256xf32>
    %264 = arith.addf %219, %263 : vector<1x256xf32>
    %c0_98 = arith.constant 0 : index
    %c96 = arith.constant 96 : index
    %265 = vector.load %arg6[%c0_98, %c96] : memref<1x512xf32, #tpu.memory_space<vmem>>, vector<1x256xf32>
    %c0_99 = arith.constant 0 : index
    %c96_100 = arith.constant 96 : index
    %266 = vector.load %arg7[%c0_99, %c96_100] : memref<1x512xf32, #tpu.memory_space<vmem>>, vector<1x256xf32>
    %c10 = arith.constant 10 : index
    %267 = memref.load %arg1[%c10] : memref<98xf32, #tpu.memory_space<smem>>
    %c59 = arith.constant 59 : index
    %268 = memref.load %arg1[%c59] : memref<98xf32, #tpu.memory_space<smem>>
    %269 = vector.broadcast %267 : f32 to vector<1x256xf32>
    %270 = arith.mulf %269, %265 : vector<1x256xf32>
    %271 = vector.broadcast %268 : f32 to vector<1x256xf32>
    %272 = arith.mulf %271, %266 : vector<1x256xf32>
    %273 = arith.addf %270, %272 : vector<1x256xf32>
    %274 = arith.mulf %253, %273 : vector<1x256xf32>
    %275 = arith.addf %230, %274 : vector<1x256xf32>
    %c0_101 = arith.constant 0 : index
    %c112 = arith.constant 112 : index
    %276 = vector.load %arg6[%c0_101, %c112] : memref<1x512xf32, #tpu.memory_space<vmem>>, vector<1x256xf32>
    %c0_102 = arith.constant 0 : index
    %c112_103 = arith.constant 112 : index
    %277 = vector.load %arg7[%c0_102, %c112_103] : memref<1x512xf32, #tpu.memory_space<vmem>>, vector<1x256xf32>
    %c17 = arith.constant 17 : index
    %278 = memref.load %arg1[%c17] : memref<98xf32, #tpu.memory_space<smem>>
    %c66 = arith.constant 66 : index
    %279 = memref.load %arg1[%c66] : memref<98xf32, #tpu.memory_space<smem>>
    %280 = vector.broadcast %278 : f32 to vector<1x256xf32>
    %281 = arith.mulf %280, %276 : vector<1x256xf32>
    %282 = vector.broadcast %279 : f32 to vector<1x256xf32>
    %283 = arith.mulf %282, %277 : vector<1x256xf32>
    %284 = arith.addf %281, %283 : vector<1x256xf32>
    %285 = arith.mulf %253, %284 : vector<1x256xf32>
    %286 = arith.addf %241, %285 : vector<1x256xf32>
    %c0_104 = arith.constant 0 : index
    %c128_105 = arith.constant 128 : index
    %287 = vector.load %arg6[%c0_104, %c128_105] : memref<1x512xf32, #tpu.memory_space<vmem>>, vector<1x256xf32>
    %c0_106 = arith.constant 0 : index
    %c128_107 = arith.constant 128 : index
    %288 = vector.load %arg7[%c0_106, %c128_107] : memref<1x512xf32, #tpu.memory_space<vmem>>, vector<1x256xf32>
    %c24 = arith.constant 24 : index
    %289 = memref.load %arg1[%c24] : memref<98xf32, #tpu.memory_space<smem>>
    %c73 = arith.constant 73 : index
    %290 = memref.load %arg1[%c73] : memref<98xf32, #tpu.memory_space<smem>>
    %291 = vector.broadcast %289 : f32 to vector<1x256xf32>
    %292 = arith.mulf %291, %287 : vector<1x256xf32>
    %293 = vector.broadcast %290 : f32 to vector<1x256xf32>
    %294 = arith.mulf %293, %288 : vector<1x256xf32>
    %295 = arith.addf %292, %294 : vector<1x256xf32>
    %296 = arith.mulf %253, %295 : vector<1x256xf32>
    %297 = arith.addf %252, %296 : vector<1x256xf32>
    %c0_108 = arith.constant 0 : index
    %c144 = arith.constant 144 : index
    %298 = vector.load %arg6[%c0_108, %c144] : memref<1x512xf32, #tpu.memory_space<vmem>>, vector<1x256xf32>
    %c0_109 = arith.constant 0 : index
    %c144_110 = arith.constant 144 : index
    %299 = vector.load %arg7[%c0_109, %c144_110] : memref<1x512xf32, #tpu.memory_space<vmem>>, vector<1x256xf32>
    %c31 = arith.constant 31 : index
    %300 = memref.load %arg1[%c31] : memref<98xf32, #tpu.memory_space<smem>>
    %c80_111 = arith.constant 80 : index
    %301 = memref.load %arg1[%c80_111] : memref<98xf32, #tpu.memory_space<smem>>
    %302 = vector.broadcast %300 : f32 to vector<1x256xf32>
    %303 = arith.mulf %302, %298 : vector<1x256xf32>
    %304 = vector.broadcast %301 : f32 to vector<1x256xf32>
    %305 = arith.mulf %304, %299 : vector<1x256xf32>
    %306 = arith.addf %303, %305 : vector<1x256xf32>
    %307 = arith.mulf %253, %306 : vector<1x256xf32>
    %308 = arith.addf %264, %307 : vector<1x256xf32>
    %c0_112 = arith.constant 0 : index
    %c160 = arith.constant 160 : index
    %309 = vector.load %arg6[%c0_112, %c160] : memref<1x512xf32, #tpu.memory_space<vmem>>, vector<1x256xf32>
    %c0_113 = arith.constant 0 : index
    %c160_114 = arith.constant 160 : index
    %310 = vector.load %arg7[%c0_113, %c160_114] : memref<1x512xf32, #tpu.memory_space<vmem>>, vector<1x256xf32>
    %c38 = arith.constant 38 : index
    %311 = memref.load %arg1[%c38] : memref<98xf32, #tpu.memory_space<smem>>
    %c87 = arith.constant 87 : index
    %312 = memref.load %arg1[%c87] : memref<98xf32, #tpu.memory_space<smem>>
    %313 = vector.broadcast %311 : f32 to vector<1x256xf32>
    %314 = arith.mulf %313, %309 : vector<1x256xf32>
    %315 = vector.broadcast %312 : f32 to vector<1x256xf32>
    %316 = arith.mulf %315, %310 : vector<1x256xf32>
    %317 = arith.addf %314, %316 : vector<1x256xf32>
    %318 = arith.mulf %253, %317 : vector<1x256xf32>
    %319 = arith.addf %275, %318 : vector<1x256xf32>
    %c0_115 = arith.constant 0 : index
    %c176 = arith.constant 176 : index
    %320 = vector.load %arg6[%c0_115, %c176] : memref<1x512xf32, #tpu.memory_space<vmem>>, vector<1x256xf32>
    %c0_116 = arith.constant 0 : index
    %c176_117 = arith.constant 176 : index
    %321 = vector.load %arg7[%c0_116, %c176_117] : memref<1x512xf32, #tpu.memory_space<vmem>>, vector<1x256xf32>
    %c45 = arith.constant 45 : index
    %322 = memref.load %arg1[%c45] : memref<98xf32, #tpu.memory_space<smem>>
    %c94_118 = arith.constant 94 : index
    %323 = memref.load %arg1[%c94_118] : memref<98xf32, #tpu.memory_space<smem>>
    %324 = vector.broadcast %322 : f32 to vector<1x256xf32>
    %325 = arith.mulf %324, %320 : vector<1x256xf32>
    %326 = vector.broadcast %323 : f32 to vector<1x256xf32>
    %327 = arith.mulf %326, %321 : vector<1x256xf32>
    %328 = arith.addf %325, %327 : vector<1x256xf32>
    %329 = arith.mulf %253, %328 : vector<1x256xf32>
    %330 = arith.addf %286, %329 : vector<1x256xf32>
    %c4 = arith.constant 4 : index
    %c0_119 = arith.constant 0 : index
    %331 = vector.load %arg3[%c4, %c0_119] : memref<8x256xf32, #tpu.memory_space<vmem>>, vector<1x256xf32>
    %c0_120 = arith.constant 0 : index
    %c81 = arith.constant 81 : index
    %332 = vector.load %arg6[%c0_120, %c81] : memref<1x512xf32, #tpu.memory_space<vmem>>, vector<1x256xf32>
    %c0_121 = arith.constant 0 : index
    %c81_122 = arith.constant 81 : index
    %333 = vector.load %arg7[%c0_121, %c81_122] : memref<1x512xf32, #tpu.memory_space<vmem>>, vector<1x256xf32>
    %c4_123 = arith.constant 4 : index
    %334 = memref.load %arg1[%c4_123] : memref<98xf32, #tpu.memory_space<smem>>
    %c53 = arith.constant 53 : index
    %335 = memref.load %arg1[%c53] : memref<98xf32, #tpu.memory_space<smem>>
    %336 = vector.broadcast %334 : f32 to vector<1x256xf32>
    %337 = arith.mulf %336, %332 : vector<1x256xf32>
    %338 = vector.broadcast %335 : f32 to vector<1x256xf32>
    %339 = arith.mulf %338, %333 : vector<1x256xf32>
    %340 = arith.addf %337, %339 : vector<1x256xf32>
    %341 = arith.mulf %331, %340 : vector<1x256xf32>
    %342 = arith.addf %297, %341 : vector<1x256xf32>
    %c0_124 = arith.constant 0 : index
    %c97 = arith.constant 97 : index
    %343 = vector.load %arg6[%c0_124, %c97] : memref<1x512xf32, #tpu.memory_space<vmem>>, vector<1x256xf32>
    %c0_125 = arith.constant 0 : index
    %c97_126 = arith.constant 97 : index
    %344 = vector.load %arg7[%c0_125, %c97_126] : memref<1x512xf32, #tpu.memory_space<vmem>>, vector<1x256xf32>
    %c11 = arith.constant 11 : index
    %345 = memref.load %arg1[%c11] : memref<98xf32, #tpu.memory_space<smem>>
    %c60 = arith.constant 60 : index
    %346 = memref.load %arg1[%c60] : memref<98xf32, #tpu.memory_space<smem>>
    %347 = vector.broadcast %345 : f32 to vector<1x256xf32>
    %348 = arith.mulf %347, %343 : vector<1x256xf32>
    %349 = vector.broadcast %346 : f32 to vector<1x256xf32>
    %350 = arith.mulf %349, %344 : vector<1x256xf32>
    %351 = arith.addf %348, %350 : vector<1x256xf32>
    %352 = arith.mulf %331, %351 : vector<1x256xf32>
    %353 = arith.addf %308, %352 : vector<1x256xf32>
    %c0_127 = arith.constant 0 : index
    %c113 = arith.constant 113 : index
    %354 = vector.load %arg6[%c0_127, %c113] : memref<1x512xf32, #tpu.memory_space<vmem>>, vector<1x256xf32>
    %c0_128 = arith.constant 0 : index
    %c113_129 = arith.constant 113 : index
    %355 = vector.load %arg7[%c0_128, %c113_129] : memref<1x512xf32, #tpu.memory_space<vmem>>, vector<1x256xf32>
    %c18 = arith.constant 18 : index
    %356 = memref.load %arg1[%c18] : memref<98xf32, #tpu.memory_space<smem>>
    %c67 = arith.constant 67 : index
    %357 = memref.load %arg1[%c67] : memref<98xf32, #tpu.memory_space<smem>>
    %358 = vector.broadcast %356 : f32 to vector<1x256xf32>
    %359 = arith.mulf %358, %354 : vector<1x256xf32>
    %360 = vector.broadcast %357 : f32 to vector<1x256xf32>
    %361 = arith.mulf %360, %355 : vector<1x256xf32>
    %362 = arith.addf %359, %361 : vector<1x256xf32>
    %363 = arith.mulf %331, %362 : vector<1x256xf32>
    %364 = arith.addf %319, %363 : vector<1x256xf32>
    %c0_130 = arith.constant 0 : index
    %c129 = arith.constant 129 : index
    %365 = vector.load %arg6[%c0_130, %c129] : memref<1x512xf32, #tpu.memory_space<vmem>>, vector<1x256xf32>
    %c0_131 = arith.constant 0 : index
    %c129_132 = arith.constant 129 : index
    %366 = vector.load %arg7[%c0_131, %c129_132] : memref<1x512xf32, #tpu.memory_space<vmem>>, vector<1x256xf32>
    %c25 = arith.constant 25 : index
    %367 = memref.load %arg1[%c25] : memref<98xf32, #tpu.memory_space<smem>>
    %c74 = arith.constant 74 : index
    %368 = memref.load %arg1[%c74] : memref<98xf32, #tpu.memory_space<smem>>
    %369 = vector.broadcast %367 : f32 to vector<1x256xf32>
    %370 = arith.mulf %369, %365 : vector<1x256xf32>
    %371 = vector.broadcast %368 : f32 to vector<1x256xf32>
    %372 = arith.mulf %371, %366 : vector<1x256xf32>
    %373 = arith.addf %370, %372 : vector<1x256xf32>
    %374 = arith.mulf %331, %373 : vector<1x256xf32>
    %375 = arith.addf %330, %374 : vector<1x256xf32>
    %c0_133 = arith.constant 0 : index
    %c145 = arith.constant 145 : index
    %376 = vector.load %arg6[%c0_133, %c145] : memref<1x512xf32, #tpu.memory_space<vmem>>, vector<1x256xf32>
    %c0_134 = arith.constant 0 : index
    %c145_135 = arith.constant 145 : index
    %377 = vector.load %arg7[%c0_134, %c145_135] : memref<1x512xf32, #tpu.memory_space<vmem>>, vector<1x256xf32>
    %c32 = arith.constant 32 : index
    %378 = memref.load %arg1[%c32] : memref<98xf32, #tpu.memory_space<smem>>
    %c81_136 = arith.constant 81 : index
    %379 = memref.load %arg1[%c81_136] : memref<98xf32, #tpu.memory_space<smem>>
    %380 = vector.broadcast %378 : f32 to vector<1x256xf32>
    %381 = arith.mulf %380, %376 : vector<1x256xf32>
    %382 = vector.broadcast %379 : f32 to vector<1x256xf32>
    %383 = arith.mulf %382, %377 : vector<1x256xf32>
    %384 = arith.addf %381, %383 : vector<1x256xf32>
    %385 = arith.mulf %331, %384 : vector<1x256xf32>
    %386 = arith.addf %342, %385 : vector<1x256xf32>
    %c0_137 = arith.constant 0 : index
    %c161 = arith.constant 161 : index
    %387 = vector.load %arg6[%c0_137, %c161] : memref<1x512xf32, #tpu.memory_space<vmem>>, vector<1x256xf32>
    %c0_138 = arith.constant 0 : index
    %c161_139 = arith.constant 161 : index
    %388 = vector.load %arg7[%c0_138, %c161_139] : memref<1x512xf32, #tpu.memory_space<vmem>>, vector<1x256xf32>
    %c39 = arith.constant 39 : index
    %389 = memref.load %arg1[%c39] : memref<98xf32, #tpu.memory_space<smem>>
    %c88 = arith.constant 88 : index
    %390 = memref.load %arg1[%c88] : memref<98xf32, #tpu.memory_space<smem>>
    %391 = vector.broadcast %389 : f32 to vector<1x256xf32>
    %392 = arith.mulf %391, %387 : vector<1x256xf32>
    %393 = vector.broadcast %390 : f32 to vector<1x256xf32>
    %394 = arith.mulf %393, %388 : vector<1x256xf32>
    %395 = arith.addf %392, %394 : vector<1x256xf32>
    %396 = arith.mulf %331, %395 : vector<1x256xf32>
    %397 = arith.addf %353, %396 : vector<1x256xf32>
    %c0_140 = arith.constant 0 : index
    %c177 = arith.constant 177 : index
    %398 = vector.load %arg6[%c0_140, %c177] : memref<1x512xf32, #tpu.memory_space<vmem>>, vector<1x256xf32>
    %c0_141 = arith.constant 0 : index
    %c177_142 = arith.constant 177 : index
    %399 = vector.load %arg7[%c0_141, %c177_142] : memref<1x512xf32, #tpu.memory_space<vmem>>, vector<1x256xf32>
    %c46 = arith.constant 46 : index
    %400 = memref.load %arg1[%c46] : memref<98xf32, #tpu.memory_space<smem>>
    %c95_143 = arith.constant 95 : index
    %401 = memref.load %arg1[%c95_143] : memref<98xf32, #tpu.memory_space<smem>>
    %402 = vector.broadcast %400 : f32 to vector<1x256xf32>
    %403 = arith.mulf %402, %398 : vector<1x256xf32>
    %404 = vector.broadcast %401 : f32 to vector<1x256xf32>
    %405 = arith.mulf %404, %399 : vector<1x256xf32>
    %406 = arith.addf %403, %405 : vector<1x256xf32>
    %407 = arith.mulf %331, %406 : vector<1x256xf32>
    %408 = arith.addf %364, %407 : vector<1x256xf32>
    %c5 = arith.constant 5 : index
    %c0_144 = arith.constant 0 : index
    %409 = vector.load %arg3[%c5, %c0_144] : memref<8x256xf32, #tpu.memory_space<vmem>>, vector<1x256xf32>
    %c0_145 = arith.constant 0 : index
    %c82 = arith.constant 82 : index
    %410 = vector.load %arg6[%c0_145, %c82] : memref<1x512xf32, #tpu.memory_space<vmem>>, vector<1x256xf32>
    %c0_146 = arith.constant 0 : index
    %c82_147 = arith.constant 82 : index
    %411 = vector.load %arg7[%c0_146, %c82_147] : memref<1x512xf32, #tpu.memory_space<vmem>>, vector<1x256xf32>
    %c5_148 = arith.constant 5 : index
    %412 = memref.load %arg1[%c5_148] : memref<98xf32, #tpu.memory_space<smem>>
    %c54 = arith.constant 54 : index
    %413 = memref.load %arg1[%c54] : memref<98xf32, #tpu.memory_space<smem>>
    %414 = vector.broadcast %412 : f32 to vector<1x256xf32>
    %415 = arith.mulf %414, %410 : vector<1x256xf32>
    %416 = vector.broadcast %413 : f32 to vector<1x256xf32>
    %417 = arith.mulf %416, %411 : vector<1x256xf32>
    %418 = arith.addf %415, %417 : vector<1x256xf32>
    %419 = arith.mulf %409, %418 : vector<1x256xf32>
    %420 = arith.addf %375, %419 : vector<1x256xf32>
    %c0_149 = arith.constant 0 : index
    %c98 = arith.constant 98 : index
    %421 = vector.load %arg6[%c0_149, %c98] : memref<1x512xf32, #tpu.memory_space<vmem>>, vector<1x256xf32>
    %c0_150 = arith.constant 0 : index
    %c98_151 = arith.constant 98 : index
    %422 = vector.load %arg7[%c0_150, %c98_151] : memref<1x512xf32, #tpu.memory_space<vmem>>, vector<1x256xf32>
    %c12 = arith.constant 12 : index
    %423 = memref.load %arg1[%c12] : memref<98xf32, #tpu.memory_space<smem>>
    %c61 = arith.constant 61 : index
    %424 = memref.load %arg1[%c61] : memref<98xf32, #tpu.memory_space<smem>>
    %425 = vector.broadcast %423 : f32 to vector<1x256xf32>
    %426 = arith.mulf %425, %421 : vector<1x256xf32>
    %427 = vector.broadcast %424 : f32 to vector<1x256xf32>
    %428 = arith.mulf %427, %422 : vector<1x256xf32>
    %429 = arith.addf %426, %428 : vector<1x256xf32>
    %430 = arith.mulf %409, %429 : vector<1x256xf32>
    %431 = arith.addf %386, %430 : vector<1x256xf32>
    %c0_152 = arith.constant 0 : index
    %c114 = arith.constant 114 : index
    %432 = vector.load %arg6[%c0_152, %c114] : memref<1x512xf32, #tpu.memory_space<vmem>>, vector<1x256xf32>
    %c0_153 = arith.constant 0 : index
    %c114_154 = arith.constant 114 : index
    %433 = vector.load %arg7[%c0_153, %c114_154] : memref<1x512xf32, #tpu.memory_space<vmem>>, vector<1x256xf32>
    %c19 = arith.constant 19 : index
    %434 = memref.load %arg1[%c19] : memref<98xf32, #tpu.memory_space<smem>>
    %c68 = arith.constant 68 : index
    %435 = memref.load %arg1[%c68] : memref<98xf32, #tpu.memory_space<smem>>
    %436 = vector.broadcast %434 : f32 to vector<1x256xf32>
    %437 = arith.mulf %436, %432 : vector<1x256xf32>
    %438 = vector.broadcast %435 : f32 to vector<1x256xf32>
    %439 = arith.mulf %438, %433 : vector<1x256xf32>
    %440 = arith.addf %437, %439 : vector<1x256xf32>
    %441 = arith.mulf %409, %440 : vector<1x256xf32>
    %442 = arith.addf %397, %441 : vector<1x256xf32>
    %c0_155 = arith.constant 0 : index
    %c130 = arith.constant 130 : index
    %443 = vector.load %arg6[%c0_155, %c130] : memref<1x512xf32, #tpu.memory_space<vmem>>, vector<1x256xf32>
    %c0_156 = arith.constant 0 : index
    %c130_157 = arith.constant 130 : index
    %444 = vector.load %arg7[%c0_156, %c130_157] : memref<1x512xf32, #tpu.memory_space<vmem>>, vector<1x256xf32>
    %c26 = arith.constant 26 : index
    %445 = memref.load %arg1[%c26] : memref<98xf32, #tpu.memory_space<smem>>
    %c75 = arith.constant 75 : index
    %446 = memref.load %arg1[%c75] : memref<98xf32, #tpu.memory_space<smem>>
    %447 = vector.broadcast %445 : f32 to vector<1x256xf32>
    %448 = arith.mulf %447, %443 : vector<1x256xf32>
    %449 = vector.broadcast %446 : f32 to vector<1x256xf32>
    %450 = arith.mulf %449, %444 : vector<1x256xf32>
    %451 = arith.addf %448, %450 : vector<1x256xf32>
    %452 = arith.mulf %409, %451 : vector<1x256xf32>
    %453 = arith.addf %408, %452 : vector<1x256xf32>
    %c0_158 = arith.constant 0 : index
    %c146 = arith.constant 146 : index
    %454 = vector.load %arg6[%c0_158, %c146] : memref<1x512xf32, #tpu.memory_space<vmem>>, vector<1x256xf32>
    %c0_159 = arith.constant 0 : index
    %c146_160 = arith.constant 146 : index
    %455 = vector.load %arg7[%c0_159, %c146_160] : memref<1x512xf32, #tpu.memory_space<vmem>>, vector<1x256xf32>
    %c33 = arith.constant 33 : index
    %456 = memref.load %arg1[%c33] : memref<98xf32, #tpu.memory_space<smem>>
    %c82_161 = arith.constant 82 : index
    %457 = memref.load %arg1[%c82_161] : memref<98xf32, #tpu.memory_space<smem>>
    %458 = vector.broadcast %456 : f32 to vector<1x256xf32>
    %459 = arith.mulf %458, %454 : vector<1x256xf32>
    %460 = vector.broadcast %457 : f32 to vector<1x256xf32>
    %461 = arith.mulf %460, %455 : vector<1x256xf32>
    %462 = arith.addf %459, %461 : vector<1x256xf32>
    %463 = arith.mulf %409, %462 : vector<1x256xf32>
    %464 = arith.addf %420, %463 : vector<1x256xf32>
    %c0_162 = arith.constant 0 : index
    %c162 = arith.constant 162 : index
    %465 = vector.load %arg6[%c0_162, %c162] : memref<1x512xf32, #tpu.memory_space<vmem>>, vector<1x256xf32>
    %c0_163 = arith.constant 0 : index
    %c162_164 = arith.constant 162 : index
    %466 = vector.load %arg7[%c0_163, %c162_164] : memref<1x512xf32, #tpu.memory_space<vmem>>, vector<1x256xf32>
    %c40 = arith.constant 40 : index
    %467 = memref.load %arg1[%c40] : memref<98xf32, #tpu.memory_space<smem>>
    %c89 = arith.constant 89 : index
    %468 = memref.load %arg1[%c89] : memref<98xf32, #tpu.memory_space<smem>>
    %469 = vector.broadcast %467 : f32 to vector<1x256xf32>
    %470 = arith.mulf %469, %465 : vector<1x256xf32>
    %471 = vector.broadcast %468 : f32 to vector<1x256xf32>
    %472 = arith.mulf %471, %466 : vector<1x256xf32>
    %473 = arith.addf %470, %472 : vector<1x256xf32>
    %474 = arith.mulf %409, %473 : vector<1x256xf32>
    %475 = arith.addf %431, %474 : vector<1x256xf32>
    %c0_165 = arith.constant 0 : index
    %c178 = arith.constant 178 : index
    %476 = vector.load %arg6[%c0_165, %c178] : memref<1x512xf32, #tpu.memory_space<vmem>>, vector<1x256xf32>
    %c0_166 = arith.constant 0 : index
    %c178_167 = arith.constant 178 : index
    %477 = vector.load %arg7[%c0_166, %c178_167] : memref<1x512xf32, #tpu.memory_space<vmem>>, vector<1x256xf32>
    %c47 = arith.constant 47 : index
    %478 = memref.load %arg1[%c47] : memref<98xf32, #tpu.memory_space<smem>>
    %c96_168 = arith.constant 96 : index
    %479 = memref.load %arg1[%c96_168] : memref<98xf32, #tpu.memory_space<smem>>
    %480 = vector.broadcast %478 : f32 to vector<1x256xf32>
    %481 = arith.mulf %480, %476 : vector<1x256xf32>
    %482 = vector.broadcast %479 : f32 to vector<1x256xf32>
    %483 = arith.mulf %482, %477 : vector<1x256xf32>
    %484 = arith.addf %481, %483 : vector<1x256xf32>
    %485 = arith.mulf %409, %484 : vector<1x256xf32>
    %486 = arith.addf %442, %485 : vector<1x256xf32>
    %c6 = arith.constant 6 : index
    %c0_169 = arith.constant 0 : index
    %487 = vector.load %arg3[%c6, %c0_169] : memref<8x256xf32, #tpu.memory_space<vmem>>, vector<1x256xf32>
    %c0_170 = arith.constant 0 : index
    %c83 = arith.constant 83 : index
    %488 = vector.load %arg6[%c0_170, %c83] : memref<1x512xf32, #tpu.memory_space<vmem>>, vector<1x256xf32>
    %c0_171 = arith.constant 0 : index
    %c83_172 = arith.constant 83 : index
    %489 = vector.load %arg7[%c0_171, %c83_172] : memref<1x512xf32, #tpu.memory_space<vmem>>, vector<1x256xf32>
    %c6_173 = arith.constant 6 : index
    %490 = memref.load %arg1[%c6_173] : memref<98xf32, #tpu.memory_space<smem>>
    %c55 = arith.constant 55 : index
    %491 = memref.load %arg1[%c55] : memref<98xf32, #tpu.memory_space<smem>>
    %492 = vector.broadcast %490 : f32 to vector<1x256xf32>
    %493 = arith.mulf %492, %488 : vector<1x256xf32>
    %494 = vector.broadcast %491 : f32 to vector<1x256xf32>
    %495 = arith.mulf %494, %489 : vector<1x256xf32>
    %496 = arith.addf %493, %495 : vector<1x256xf32>
    %497 = arith.mulf %487, %496 : vector<1x256xf32>
    %498 = arith.addf %453, %497 : vector<1x256xf32>
    %c0_174 = arith.constant 0 : index
    %c99 = arith.constant 99 : index
    %499 = vector.load %arg6[%c0_174, %c99] : memref<1x512xf32, #tpu.memory_space<vmem>>, vector<1x256xf32>
    %c0_175 = arith.constant 0 : index
    %c99_176 = arith.constant 99 : index
    %500 = vector.load %arg7[%c0_175, %c99_176] : memref<1x512xf32, #tpu.memory_space<vmem>>, vector<1x256xf32>
    %c13 = arith.constant 13 : index
    %501 = memref.load %arg1[%c13] : memref<98xf32, #tpu.memory_space<smem>>
    %c62 = arith.constant 62 : index
    %502 = memref.load %arg1[%c62] : memref<98xf32, #tpu.memory_space<smem>>
    %503 = vector.broadcast %501 : f32 to vector<1x256xf32>
    %504 = arith.mulf %503, %499 : vector<1x256xf32>
    %505 = vector.broadcast %502 : f32 to vector<1x256xf32>
    %506 = arith.mulf %505, %500 : vector<1x256xf32>
    %507 = arith.addf %504, %506 : vector<1x256xf32>
    %508 = arith.mulf %487, %507 : vector<1x256xf32>
    %509 = arith.addf %464, %508 : vector<1x256xf32>
    %c0_177 = arith.constant 0 : index
    %c115 = arith.constant 115 : index
    %510 = vector.load %arg6[%c0_177, %c115] : memref<1x512xf32, #tpu.memory_space<vmem>>, vector<1x256xf32>
    %c0_178 = arith.constant 0 : index
    %c115_179 = arith.constant 115 : index
    %511 = vector.load %arg7[%c0_178, %c115_179] : memref<1x512xf32, #tpu.memory_space<vmem>>, vector<1x256xf32>
    %c20 = arith.constant 20 : index
    %512 = memref.load %arg1[%c20] : memref<98xf32, #tpu.memory_space<smem>>
    %c69 = arith.constant 69 : index
    %513 = memref.load %arg1[%c69] : memref<98xf32, #tpu.memory_space<smem>>
    %514 = vector.broadcast %512 : f32 to vector<1x256xf32>
    %515 = arith.mulf %514, %510 : vector<1x256xf32>
    %516 = vector.broadcast %513 : f32 to vector<1x256xf32>
    %517 = arith.mulf %516, %511 : vector<1x256xf32>
    %518 = arith.addf %515, %517 : vector<1x256xf32>
    %519 = arith.mulf %487, %518 : vector<1x256xf32>
    %520 = arith.addf %475, %519 : vector<1x256xf32>
    %c0_180 = arith.constant 0 : index
    %c131 = arith.constant 131 : index
    %521 = vector.load %arg6[%c0_180, %c131] : memref<1x512xf32, #tpu.memory_space<vmem>>, vector<1x256xf32>
    %c0_181 = arith.constant 0 : index
    %c131_182 = arith.constant 131 : index
    %522 = vector.load %arg7[%c0_181, %c131_182] : memref<1x512xf32, #tpu.memory_space<vmem>>, vector<1x256xf32>
    %c27 = arith.constant 27 : index
    %523 = memref.load %arg1[%c27] : memref<98xf32, #tpu.memory_space<smem>>
    %c76 = arith.constant 76 : index
    %524 = memref.load %arg1[%c76] : memref<98xf32, #tpu.memory_space<smem>>
    %525 = vector.broadcast %523 : f32 to vector<1x256xf32>
    %526 = arith.mulf %525, %521 : vector<1x256xf32>
    %527 = vector.broadcast %524 : f32 to vector<1x256xf32>
    %528 = arith.mulf %527, %522 : vector<1x256xf32>
    %529 = arith.addf %526, %528 : vector<1x256xf32>
    %530 = arith.mulf %487, %529 : vector<1x256xf32>
    %531 = arith.addf %486, %530 : vector<1x256xf32>
    %c0_183 = arith.constant 0 : index
    %c147 = arith.constant 147 : index
    %532 = vector.load %arg6[%c0_183, %c147] : memref<1x512xf32, #tpu.memory_space<vmem>>, vector<1x256xf32>
    %c0_184 = arith.constant 0 : index
    %c147_185 = arith.constant 147 : index
    %533 = vector.load %arg7[%c0_184, %c147_185] : memref<1x512xf32, #tpu.memory_space<vmem>>, vector<1x256xf32>
    %c34 = arith.constant 34 : index
    %534 = memref.load %arg1[%c34] : memref<98xf32, #tpu.memory_space<smem>>
    %c83_186 = arith.constant 83 : index
    %535 = memref.load %arg1[%c83_186] : memref<98xf32, #tpu.memory_space<smem>>
    %536 = vector.broadcast %534 : f32 to vector<1x256xf32>
    %537 = arith.mulf %536, %532 : vector<1x256xf32>
    %538 = vector.broadcast %535 : f32 to vector<1x256xf32>
    %539 = arith.mulf %538, %533 : vector<1x256xf32>
    %540 = arith.addf %537, %539 : vector<1x256xf32>
    %541 = arith.mulf %487, %540 : vector<1x256xf32>
    %542 = arith.addf %498, %541 : vector<1x256xf32>
    %c0_187 = arith.constant 0 : index
    %c163 = arith.constant 163 : index
    %543 = vector.load %arg6[%c0_187, %c163] : memref<1x512xf32, #tpu.memory_space<vmem>>, vector<1x256xf32>
    %c0_188 = arith.constant 0 : index
    %c163_189 = arith.constant 163 : index
    %544 = vector.load %arg7[%c0_188, %c163_189] : memref<1x512xf32, #tpu.memory_space<vmem>>, vector<1x256xf32>
    %c41 = arith.constant 41 : index
    %545 = memref.load %arg1[%c41] : memref<98xf32, #tpu.memory_space<smem>>
    %c90 = arith.constant 90 : index
    %546 = memref.load %arg1[%c90] : memref<98xf32, #tpu.memory_space<smem>>
    %547 = vector.broadcast %545 : f32 to vector<1x256xf32>
    %548 = arith.mulf %547, %543 : vector<1x256xf32>
    %549 = vector.broadcast %546 : f32 to vector<1x256xf32>
    %550 = arith.mulf %549, %544 : vector<1x256xf32>
    %551 = arith.addf %548, %550 : vector<1x256xf32>
    %552 = arith.mulf %487, %551 : vector<1x256xf32>
    %553 = arith.addf %509, %552 : vector<1x256xf32>
    %c0_190 = arith.constant 0 : index
    %c179 = arith.constant 179 : index
    %554 = vector.load %arg6[%c0_190, %c179] : memref<1x512xf32, #tpu.memory_space<vmem>>, vector<1x256xf32>
    %c0_191 = arith.constant 0 : index
    %c179_192 = arith.constant 179 : index
    %555 = vector.load %arg7[%c0_191, %c179_192] : memref<1x512xf32, #tpu.memory_space<vmem>>, vector<1x256xf32>
    %c48 = arith.constant 48 : index
    %556 = memref.load %arg1[%c48] : memref<98xf32, #tpu.memory_space<smem>>
    %c97_193 = arith.constant 97 : index
    %557 = memref.load %arg1[%c97_193] : memref<98xf32, #tpu.memory_space<smem>>
    %558 = vector.broadcast %556 : f32 to vector<1x256xf32>
    %559 = arith.mulf %558, %554 : vector<1x256xf32>
    %560 = vector.broadcast %557 : f32 to vector<1x256xf32>
    %561 = arith.mulf %560, %555 : vector<1x256xf32>
    %562 = arith.addf %559, %561 : vector<1x256xf32>
    %563 = arith.mulf %487, %562 : vector<1x256xf32>
    %564 = arith.addf %520, %563 : vector<1x256xf32>
    %565 = arith.addf %564, %531 : vector<1x256xf32>
    %566 = arith.addf %542, %553 : vector<1x256xf32>
    %567 = arith.addf %565, %566 : vector<1x256xf32>
    %c0_194 = arith.constant 0 : index
    %568 = memref.load %arg2[%c0_194] : memref<1xf32, #tpu.memory_space<smem>>
    %569 = vector.broadcast %568 : f32 to vector<1x256xf32>
    %570 = arith.addf %567, %569 : vector<1x256xf32>
    %571 = arith.negf %570 : vector<1x256xf32>
    %572 = math.exp %571 : vector<1x256xf32>
    %cst_195 = arith.constant 1.000000e+00 : f32
    %573 = vector.broadcast %cst_195 : f32 to vector<1x256xf32>
    %574 = arith.addf %573, %572 : vector<1x256xf32>
    %575 = arith.divf %573, %574 : vector<1x256xf32>
    %c0_196 = arith.constant 0 : index
    %c0_197 = arith.constant 0 : index
    %c0_198 = arith.constant 0 : index
    %576 = vector.load %arg4[%c0_196, %c0_197, %c0_198] : memref<1x4x256xf32, #tpu.memory_space<vmem>>, vector<1x4x256xf32>
    %577 = vector.shape_cast %576 : vector<1x4x256xf32> to vector<4x256xf32>
    %578 = vector.broadcast %575 : vector<1x256xf32> to vector<4x256xf32>
    %579 = arith.mulf %577, %578 : vector<4x256xf32>
    %c0_199 = arith.constant 0 : index
    %c0_200 = arith.constant 0 : index
    %c0_201 = arith.constant 0 : index
    %580 = vector.load %arg5[%c0_199, %c0_200, %c0_201] : memref<1x4x256xf32, #tpu.memory_space<vmem>>, vector<1x4x256xf32>
    %581 = vector.shape_cast %580 : vector<1x4x256xf32> to vector<4x256xf32>
    %582 = vector.shape_cast %579 : vector<4x256xf32> to vector<1x4x256xf32>
    tpu.vector_store %arg5[%c0_199, %c0_200, %c0_201], %582 {strides = array<i32>} : memref<1x4x256xf32, #tpu.memory_space<vmem>>, vector<1x4x256xf32>,
    return
  }
  func.func @transform_0(%arg0: i32) -> i32 {
    %c0_i32 = arith.constant 0 : i32
    %c0_i32_0 = arith.constant 0 : i32
    return %c0_i32 : i32
  }
  func.func @transform_1(%arg0: i32) -> i32 {
    %c0_i32 = arith.constant 0 : i32
    %c0_i32_0 = arith.constant 0 : i32
    return %c0_i32 : i32
  }
  func.func @transform_2(%arg0: i32) -> (i32, i32) {
    %c0_i32 = arith.constant 0 : i32
    %c0_i32_0 = arith.constant 0 : i32
    %c0_i32_1 = arith.constant 0 : i32
    return %c0_i32, %c0_i32_0 : i32, i32
  }
  func.func @transform_3(%arg0: i32) -> (i32, i32, i32) {
    %c0_i32 = arith.constant 0 : i32
    %c0_i32_0 = arith.constant 0 : i32
    %c0_i32_1 = arith.constant 0 : i32
    return %arg0, %c0_i32, %c0_i32_0 : i32, i32, i32
  }
  func.func @transform_4(%arg0: i32) -> (i32, i32, i32) {
    %c0_i32 = arith.constant 0 : i32
    %c0_i32_0 = arith.constant 0 : i32
    %c0_i32_1 = arith.constant 0 : i32
    return %arg0, %c0_i32, %c0_i32_0 : i32, i32, i32
  }
}

</mosaic_0001>

<llo_original>
// kernel: tpu_custom_call.1
$region0: #{tpu_custom_call.1}
  #allocation0 [shape = 'u32[]', space=smem, size = 0x4, offset = 0x4, fixed_abs, tag = 'smem constant byte address 0x4 - core index']
  #allocation1 [shape = 'u32[144,128]{1,0:T(1,128)}', space=vmem, size = 0x12000, scoped, tag = 'internal scratch']
  #allocation2 [shape = 'f32[1,512]{1,0:T(1,128)}', space=vmem, size = 0x800, scoped, tag = 'scratch operand']
  #allocation3 [shape = 'f32[1,512]{1,0:T(1,128)}', space=vmem, size = 0x800, scoped, tag = 'scratch operand']
  #allocation4 [shape = 'f32[1]{0:T(128)S(6)}', space=smem, size = 0x200, scoped, tag = 'scoped memory for tpu_custom_call.1']
  %s0 = inlined_call_operand.vmem [shape: f32[98], index: 0, kind: input, shape index: {}]
  %s1 = inlined_call_operand.<no memory space> [shape: f32[1], index: 1, kind: input, shape index: {}]
  %s2 = inlined_call_operand.vmem [shape: f32[8,256], index: 2, kind: input, shape index: {}]
  %s3 = inlined_call_operand.hbm [shape: f32[2,4,256], index: 3, kind: input, shape index: {}, may-alias: {3,4}]
  %s4 = inlined_call_operand.hbm [shape: f32[2,4,256], index: 4, kind: output, shape index: {}, may-alias: {3,4}]
  %s5 = sld [smem:[#allocation0]]
  $region57: #{tpu_custom_call.1} parent=0
    _
  %s7 = ssub.s32 1, %s5
  %s8 = scalar_select 0, %s7, %s5
  %9 = sst [smem:[#allocation4]] %s1
  $region1: #{tpu_custom_call.1} parent=0
    #allocation5 [shape = 'u8[512]{0}', space=smem, size = 0x200, scoped, tag = 'input window, operand 0, single buffered']
    #allocation6 [shape = 's32[2]{0}', space=sflag, size = 0x8, scoped, tag = 'scoped memory for tpu_custom_call.1']
    #allocation7 [shape = 's32[2]{0}', space=sflag, size = 0x8, scoped, tag = 'scoped memory for tpu_custom_call.1']
    #allocation8 [shape = 's32[2]{0}', space=sflag, size = 0x8, scoped, tag = 'scoped memory for tpu_custom_call.1']
    #allocation9 [shape = 'u8[8192]{0}', space=vmem, size = 0x2000, scoped, tag = 'input window, operand 3']
    #allocation10 [shape = 'u8[8192]{0}', space=vmem, size = 0x2000, scoped, tag = 'output window, operand 0']
    %10 = vsyncpa [#allocation8], 0
    %11 = vsyncpa [#allocation6], 0
    %s12 = scalar_lea.sflag [#allocation6], 1
    %13 = vsyncpa %s12, 0
    %14 = vsyncpa [#allocation7], 0
    %s15 = scalar_lea.sflag [#allocation7], 1
    %16 = vsyncpa %s15, 0
    loop: start=0, step=1, limit=4
    $region2: #{tpu_custom_call.1} parent=1 // loop_pre_header
      _
    $region3: #{tpu_custom_call.1} parent=1 // loop_header
      %s18 = sphi 0, %s22
      %p19 = scmp.ge.s32.totalorder %s18, 4
      %s26 = sphi 0, %s26
      %s28 = sphi 0, %s26
      %s29 = sphi 0, %s28
      %s43 = sphi 0, %s29
      %s47 = sphi 0, %s47
      %s49 = sphi 0, %s47
      %s50 = sphi 0, %s49
      %s64 = sphi 0, %s50
      %s68 = sphi 0, %s68
      %s70 = sphi 0, %s68
      %s71 = sphi 0, %s70
      %s85 = sphi 0, %s71
      %s91 = sphi 0, %s93
      %s94 = sphi 0, %s91
      %s95 = sphi 0, %s94
      %s111 = sphi 0, %s95
      %s117 = sphi 0, %s119
      %s120 = sphi 0, %s117
      %s121 = sphi 0, %s120
      %s137 = sphi 0, %s121
    $region4: #{tpu_custom_call.1} parent=1 // loop_header_branch
      %21 = sbr.rel (%p19) target = $region8
    $region5: #{tpu_custom_call.1} parent=1 // loop_body
      %s23 = ssub.s32 %s18, 1
      %s24 = ssub.s32 %s18, 2
      %s25 = sadd.s32 %s18, 1
      %s27 = sadd.s32 %s26, 1
      %p30 = scmp.eq.s32.totalorder %s18, 1
      %p31 = scmp.ne.s32.totalorder %s26, %s28
      %p32 = scmp.eq.s32.totalorder %s18, 0
      %p33 = por %p31, %p32
      %p34 = scmp.ne.s32.totalorder %s26, %s28
      %p35 = scmp.eq.s32.totalorder %s23, 1
      %p36 = por %p34, %p35
      %p37 = scmp.ne.s32.totalorder %s28, %s29
      %p38 = scmp.eq.s32.totalorder %s23, 0
      %p39 = por %p37, %p38
      %p40 = scmp.ne.s32.totalorder %s28, %s29
      %p41 = scmp.eq.s32.totalorder %s24, 1
      %p42 = por %p40, %p41
      %p44 = scmp.ne.s32.totalorder %s29, %s43
      %p45 = scmp.eq.s32.totalorder %s24, 0
      %p46 = por %p44, %p45
      %s48 = sadd.s32 %s47, 1
      %p51 = scmp.eq.s32.totalorder %s18, 1
      %p52 = scmp.ne.s32.totalorder %s47, %s49
      %p53 = scmp.eq.s32.totalorder %s18, 0
      %p54 = por %p52, %p53
      %p55 = scmp.ne.s32.totalorder %s47, %s49
      %p56 = scmp.eq.s32.totalorder %s23, 1
      %p57 = por %p55, %p56
      %p58 = scmp.ne.s32.totalorder %s49, %s50
      %p59 = scmp.eq.s32.totalorder %s23, 0
      %p60 = por %p58, %p59
      %p61 = scmp.ne.s32.totalorder %s49, %s50
      %p62 = scmp.eq.s32.totalorder %s24, 1
      %p63 = por %p61, %p62
      %p65 = scmp.ne.s32.totalorder %s50, %s64
      %p66 = scmp.eq.s32.totalorder %s24, 0
      %p67 = por %p65, %p66
      %s69 = sadd.s32 %s68, 1
      %p72 = scmp.eq.s32.totalorder %s18, 1
      %p73 = scmp.ne.s32.totalorder %s68, %s70
      %p74 = scmp.eq.s32.totalorder %s18, 0
      %p75 = por %p73, %p74
      %p76 = scmp.ne.s32.totalorder %s68, %s70
      %p77 = scmp.eq.s32.totalorder %s23, 1
      %p78 = por %p76, %p77
      %p79 = scmp.ne.s32.totalorder %s70, %s71
      %p80 = scmp.eq.s32.totalorder %s23, 0
      %p81 = por %p79, %p80
      %p82 = scmp.ne.s32.totalorder %s70, %s71
      %p83 = scmp.eq.s32.totalorder %s24, 1
      %p84 = por %p82, %p83
      %p86 = scmp.ne.s32.totalorder %s71, %s85
      %p87 = scmp.eq.s32.totalorder %s24, 0
      %p88 = por %p86, %p87
      %s89 = ssub.s32 %s18, %s25
      %p90 = scmp.eq.s32.totalorder %s89, 0
      %s92 = sadd.s32 %s91, 1
      %s93 = scalar_select %p90, %s91, %s92
      %p96 = pneg %p90
      %p97 = scmp.eq.s32.totalorder %s18, 1
      %p98 = por %p96, %p97
      %p99 = scmp.ne.s32.totalorder %s91, %s94
      %p100 = scmp.eq.s32.totalorder %s18, 0
      %p101 = por %p99, %p100
      %p102 = scmp.ne.s32.totalorder %s91, %s94
      %p103 = scmp.eq.s32.totalorder %s23, 1
      %p104 = por %p102, %p103
      %p105 = scmp.ne.s32.totalorder %s94, %s95
      %p106 = scmp.eq.s32.totalorder %s23, 0
      %p107 = por %p105, %p106
      %p108 = scmp.ne.s32.totalorder %s94, %s95
      %p109 = scmp.eq.s32.totalorder %s24, 1
      %p110 = por %p108, %p109
      %p112 = scmp.ne.s32.totalorder %s95, %s111
      %p113 = scmp.eq.s32.totalorder %s24, 0
      %p114 = por %p112, %p113
      %s115 = ssub.s32 %s18, %s25
      %p116 = scmp.eq.s32.totalorder %s115, 0
      %s118 = sadd.s32 %s117, 1
      %s119 = scalar_select %p116, %s117, %s118
      %p122 = pneg %p116
      %p123 = scmp.eq.s32.totalorder %s18, 1
      %p124 = por %p122, %p123
      %p125 = scmp.ne.s32.totalorder %s117, %s120
      %p126 = scmp.eq.s32.totalorder %s18, 0
      %p127 = por %p125, %p126
      %p128 = scmp.ne.s32.totalorder %s117, %s120
      %p129 = scmp.eq.s32.totalorder %s23, 1
      %p130 = por %p128, %p129
      %p131 = scmp.ne.s32.totalorder %s120, %s121
      %p132 = scmp.eq.s32.totalorder %s23, 0
      %p133 = por %p131, %p132
      %p134 = scmp.ne.s32.totalorder %s120, %s121
      %p135 = scmp.eq.s32.totalorder %s24, 1
      %p136 = por %p134, %p135
      %p138 = scmp.ne.s32.totalorder %s121, %s137
      %p139 = scmp.eq.s32.totalorder %s24, 0
      %p140 = por %p138, %p139
      %p141 = scmp.le.s32.totalorder 1, %s18
      %p142 = scmp.lt.s32.totalorder %s18, 3
      %p143 = pnand %p141, %p142
      %p144 = pneg %p143
      // Predicated region
      $region9: #{tpu_custom_call.1} parent=5 // pred_check
        _
      $region10: #{tpu_custom_call.1} parent=5 // pred_check_branch
        %146 = sbr.rel (%p143) target = $region12
      $region11: #{tpu_custom_call.1} parent=5 // pred_region
        %s147 = ssub.s32 %s18, 1
        // Predicated region
        $region13: #{tpu_custom_call.1} parent=11 // pred_check
          %p148 = pneg %p39
        $region14: #{tpu_custom_call.1} parent=11 // pred_check_branch
          %150 = sbr.rel (%p148) target = $region16
        $region15: #{tpu_custom_call.1} parent=11 // pred_region
          %s152 = ssub.s32 16, 16
          %153 = vsyncadd [#allocation8], %s152
          %s155 = sshll.u32 %s0, 4
          %s156 = int_to_ptr.vmem [resolvable:$true] %s155
          %158 = dma.vmem_to_smem %s156, 16, [#allocation5], [#allocation8]
        $region16: #{tpu_custom_call.1} parent=11 // pred_fallthru
          _
        // Predicated region
        $region17: #{tpu_custom_call.1} parent=11 // pred_check
          %p159 = pneg %p60
        $region18: #{tpu_custom_call.1} parent=11 // pred_check_branch
          %161 = sbr.rel (%p159) target = $region20
        $region19: #{tpu_custom_call.1} parent=11 // pred_region
          _
        $region20: #{tpu_custom_call.1} parent=11 // pred_fallthru
          _
        // Predicated region
        $region21: #{tpu_custom_call.1} parent=11 // pred_check
          %p162 = pneg %p81
        $region22: #{tpu_custom_call.1} parent=11 // pred_check_branch
          %164 = sbr.rel (%p162) target = $region24
        $region23: #{tpu_custom_call.1} parent=11 // pred_region
          _
        $region24: #{tpu_custom_call.1} parent=11 // pred_fallthru
          _
      $region12: #{tpu_custom_call.1} parent=5 // pred_fallthru
        _
      %p165 = scmp.lt.s32.totalorder %s18, 2
      // Predicated region
      $region25: #{tpu_custom_call.1} parent=5 // pred_check
        %p166 = pneg %p165
      $region26: #{tpu_custom_call.1} parent=5 // pred_check_branch
        %168 = sbr.rel (%p166) target = $region28
      $region27: #{tpu_custom_call.1} parent=5 // pred_region
        // Predicated region
        $region29: #{tpu_custom_call.1} parent=27 // pred_check
          %p169 = pneg %p101
        $region30: #{tpu_custom_call.1} parent=27 // pred_check_branch
          %171 = sbr.rel (%p169) target = $region32
        $region31: #{tpu_custom_call.1} parent=27 // pred_region
          %s172 = sand.u32 %s91, 1
          %s173 = scalar_lea.sflag [#allocation6], %s172
          %s174 = sand.u32 %s91, 1
          %s175 = smul.addr %s174, 8
          %s176 = scalar_lea.vmem [#allocation9], %s175
          %s178 = ssub.s32 128, 128
          %179 = vsyncadd %s173, %s178
          %s180 = smul.addr %s18, 2
          %s181 = smul.addr %s180, 64
          %s182 = scalar_lea.hbm %s3, %s181
          %s184 = sshll.u32 %s176, 4
          %s185 = int_to_ptr.vmem [resolvable:$true] %s184
          %187 = dma.hbm_to_vmem [thread:$0]  %s182, 128, %s185, %s173
        $region32: #{tpu_custom_call.1} parent=27 // pred_fallthru
          _
      $region28: #{tpu_custom_call.1} parent=5 // pred_fallthru
        _
      %p188 = scmp.le.s32.totalorder 1, %s18
      %p189 = scmp.lt.s32.totalorder %s18, 3
      %p190 = pnand %p188, %p189
      %p191 = pneg %p190
      // Predicated region
      $region33: #{tpu_custom_call.1} parent=5 // pred_check
        _
      $region34: #{tpu_custom_call.1} parent=5 // pred_check_branch
        %193 = sbr.rel (%p190) target = $region36
      $region35: #{tpu_custom_call.1} parent=5 // pred_region
        %s194 = ssub.s32 %s18, 1
        // Predicated region
        $region37: #{tpu_custom_call.1} parent=35 // pred_check
          %p195 = pneg %p39
        $region38: #{tpu_custom_call.1} parent=35 // pred_check_branch
          %197 = sbr.rel (%p195) target = $region40
        $region39: #{tpu_custom_call.1} parent=35 // pred_region
          %198 = dma.done [#allocation8], 16
        $region40: #{tpu_custom_call.1} parent=35 // pred_fallthru
          _
        %s199 = sand.u32 %s94, 1
        %s200 = scalar_lea.sflag [#allocation6], %s199
        %s201 = sand.u32 %s94, 1
        %s202 = smul.addr %s201, 8
        %s203 = scalar_lea.vmem [#allocation9], %s202
        // Predicated region
        $region41: #{tpu_custom_call.1} parent=35 // pred_check
          %p204 = pneg %p107
        $region42: #{tpu_custom_call.1} parent=35 // pred_check_branch
          %206 = sbr.rel (%p204) target = $region44
        $region43: #{tpu_custom_call.1} parent=35 // pred_region
          %207 = dma.done %s200, 128
        $region44: #{tpu_custom_call.1} parent=35 // pred_fallthru
          _
        %208 = sfence
        %p209 = pneg %p39
        %p210 = pneg %p36
        %p211 = pneg %p60
        %p212 = pneg %p57
        %p213 = pneg %p81
        %p214 = pneg %p78
        %s215 = sand.u32 %s94, 1
        %s216 = scalar_lea.sflag [#allocation6], %s215
        %s217 = sand.u32 %s94, 1
        %s218 = smul.addr %s217, 8
        %s219 = scalar_lea.vmem [#allocation9], %s218
        %p220 = pneg %p107
        %p221 = pneg %p104
        %p222 = pneg %p133
        %p223 = pneg %p130
        %s224 = sand.u32 %s120, 1
        %s225 = scalar_lea.sflag [#allocation7], %s224
        %s226 = sand.u32 %s120, 1
        %s227 = smul.addr %s226, 8
        %s228 = scalar_lea.vmem [#allocation10], %s227
        %v229 = vld [vmem:[%s203] sm:$0xff]
        %v231 = vcombine.high %v229, %v229
        %vm233 = vcmask 1043456
        %v234 = vsel %vm233, %v229, 0.0
        %v235 = vrot.slane %v234, 4
        %v236 = vadd.f32 %v234, %v235
        %v237 = vrot.slane %v236, 2
        %v238 = vadd.f32 %v236, %v237
        %v239 = vrot.slane %v238, 1
        %v240 = vadd.f32 %v238, %v239
        %v241 = vsel %vm233, %v231, 0.0
        %v242 = vrot.slane %v241, 4
        %v243 = vadd.f32 %v241, %v242
        %v244 = vrot.slane %v243, 2
        %v245 = vadd.f32 %v243, %v244
        %v246 = vrot.slane %v245, 1
        %v247 = vadd.f32 %v245, %v246
        %v248 = vrcp.pop 4.0
        %v249 = vmul.f32 %v240, %v248
        %v250 = vmul.f32 %v247, %v248
        %v251 = vsel %vm233, %v229, -inf
        %v252 = vrot.slane %v251, 4
        %v253 = vmax.f32 %v251, %v252
        %v254 = vrot.slane %v253, 2
        %v255 = vmax.f32 %v253, %v254
        %v256 = vrot.slane %v255, 1
        %v257 = vmax.f32 %v255, %v256
        %v258 = vsel %vm233, %v231, -inf
        %v259 = vrot.slane %v258, 4
        %v260 = vmax.f32 %v258, %v259
        %v261 = vrot.slane %v260, 2
        %v262 = vmax.f32 %v260, %v261
        %v263 = vrot.slane %v262, 1
        %v264 = vmax.f32 %v262, %v263
        %v265 = vlaneseq
        %vm266 = vcmp.ge.s32.totalorder %v265, 0
        %vm267 = vcmp.lt.s32.totalorder %v265, 128
        %vm268 = vmand %vm266, %vm267
        %269 = vst.msk [vmem:[#allocation2] sm:$0x1] %vm268, 0.0
        %270 = vst.msk [vmem:[#allocation2 + $0x3] sm:$0x1] %vm268, 0.0
        %271 = vst.msk [vmem:[#allocation3] sm:$0x1] %vm268, 0.0
        %272 = vst.msk [vmem:[#allocation3 + $0x3] sm:$0x1] %vm268, 0.0
        %v275 = vcombine.low %v249, %v250
        %v277 = vunpack.c.l.s4 1966171168
        %v278 = vunpack.c.0.s8 %v277
        %v279 = vlaneseq
        %v280 = vshrl.u32 %v279, 7
        %v281 = vsub.s32 %v278, %v280
        %v282 = vrot.slane %v275, %v281
        %v284 = vunpack.c.l.s4 1966171168
        %v285 = vunpack.c.0.s8 %v284
        %v286 = vlaneseq
        %v287 = vshrl.u32 %v286, 7
        %v288 = vsub.s32 %v285, %v287
        %v289 = vrot.slane %v282, %v288
        %vm291 = vcmp.lt.s32.totalorder %v265, 256
        %vm292 = vmand %vm266, %vm291
        %293 = vst.msk [vmem:[#allocation2 + $0x1] sm:$0x3] %vm292, %v289
        %v296 = vcombine.low %v257, %v264
        %v298 = vunpack.c.l.s4 1966171168
        %v299 = vunpack.c.0.s8 %v298
        %v300 = vlaneseq
        %v301 = vshrl.u32 %v300, 7
        %v302 = vsub.s32 %v299, %v301
        %v303 = vrot.slane %v296, %v302
        %v305 = vunpack.c.l.s4 1966171168
        %v306 = vunpack.c.0.s8 %v305
        %v307 = vlaneseq
        %v308 = vshrl.u32 %v307, 7
        %v309 = vsub.s32 %v306, %v308
        %v310 = vrot.slane %v303, %v309
        %312 = vst.msk [vmem:[#allocation3 + $0x1] sm:$0x3] %vm292, %v310
        %v313 = vld [vmem:[%s2] ss:$8 sm:$0x3]
        %v314 = vld [vmem:[#allocation2] sm:$0x7]
        %v315 = vld [vmem:[#allocation3] sm:$0x7]
        %s316 = sld [smem:[#allocation5]]
        %s317 = sld [smem:[#allocation5 + $0x31]]
        %v318 = vstv %s316
        %v319 = vmul.f32 %v318, %v314
        %v320 = vstv %s317
        %v321 = vmul.f32 %v320, %v315
        %v322 = vadd.f32 %v319, %v321
        %324 = vrot.lane.b32.xlu0 %v322, 51
        %v325 = vpop.permute.xlu0 %324
        %v326 = vrot.slane %v325, 1
        %vm327 = vcmask 416768
        %v328 = vsel %vm327, %v325, %v326
        %v330 = vmul.f32 %v313, %v328
        %v331 = vadd.f32 %v330, 0.0
        %s332 = sld [smem:[#allocation5 + $0x7]]
        %s333 = sld [smem:[#allocation5 + $0x38]]
        %v334 = vstv %s332
        %v335 = vmul.f32 %v334, %v314
        %v336 = vstv %s333
        %v337 = vmul.f32 %v336, %v315
        %v338 = vadd.f32 %v335, %v337
        %340 = vrot.lane.b32.xlu0 %v338, 35
        %v341 = vpop.permute.xlu0 %340
        %v342 = vrot.slane %v341, 1
        %vm343 = vcmask 285696
        %v344 = vsel %vm343, %v341, %v342
        %v346 = vmul.f32 %v313, %v344
        %v347 = vadd.f32 %v346, 0.0
        %s348 = sld [smem:[#allocation5 + $0xe]]
        %s349 = sld [smem:[#allocation5 + $0x3f]]
        %v350 = vstv %s348
        %v351 = vmul.f32 %v350, %v314
        %v352 = vstv %s349
        %v353 = vmul.f32 %v352, %v315
        %v354 = vadd.f32 %v351, %v353
        %356 = vrot.lane.b32.xlu0 %v354, 19
        %v357 = vpop.permute.xlu0 %356
        %v358 = vrot.slane %v357, 1
        %vm359 = vcmask 154624
        %v360 = vsel %vm359, %v357, %v358
        %v362 = vmul.f32 %v313, %v360
        %v363 = vadd.f32 %v362, 0.0
        %s364 = sld [smem:[#allocation5 + $0x15]]
        %s365 = sld [smem:[#allocation5 + $0x46]]
        %v366 = vstv %s364
        %v367 = vmul.f32 %v366, %v314
        %v368 = vstv %s365
        %v369 = vmul.f32 %v368, %v315
        %v370 = vadd.f32 %v367, %v369
        %372 = vrot.lane.b32.xlu0 %v370, 3
        %v373 = vpop.permute.xlu0 %372
        %v374 = vrot.slane %v373, 1
        %vm375 = vcmask 23552
        %v376 = vsel %vm375, %v373, %v374
        %v378 = vmul.f32 %v313, %v376
        %v379 = vadd.f32 %v378, 0.0
        %v380 = vld [vmem:[#allocation2 + $0x1] sm:$0x7]
        %v381 = vld [vmem:[#allocation3 + $0x1] sm:$0x7]
        %s382 = sld [smem:[#allocation5 + $0x1c]]
        %s383 = sld [smem:[#allocation5 + $0x4d]]
        %v384 = vstv %s382
        %v385 = vmul.f32 %v384, %v380
        %v386 = vstv %s383
        %v387 = vmul.f32 %v386, %v381
        %v388 = vadd.f32 %v385, %v387
        %390 = vrot.lane.b32.xlu0 %v388, 115
        %v391 = vpop.permute.xlu0 %390
        %v392 = vrot.slane %v391, 1
        %vm393 = vcmask 941056
        %v394 = vsel %vm393, %v391, %v392
        %v396 = vmul.f32 %v313, %v394
        %v397 = vadd.f32 %v331, %v396
        %s398 = sld [smem:[#allocation5 + $0x23]]
        %s399 = sld [smem:[#allocation5 + $0x54]]
        %v400 = vstv %s398
        %v401 = vmul.f32 %v400, %v380
        %v402 = vstv %s399
        %v403 = vmul.f32 %v402, %v381
        %v404 = vadd.f32 %v401, %v403
        %406 = vrot.lane.b32.xlu0 %v404, 99
        %v407 = vpop.permute.xlu0 %406
        %v408 = vrot.slane %v407, 1
        %vm409 = vcmask 809984
        %v410 = vsel %vm409, %v407, %v408
        %v412 = vmul.f32 %v313, %v410
        %v413 = vadd.f32 %v347, %v412
        %s414 = sld [smem:[#allocation5 + $0x2a]]
        %s415 = sld [smem:[#allocation5 + $0x5b]]
        %v416 = vstv %s414
        %v417 = vmul.f32 %v416, %v380
        %v418 = vstv %s415
        %v419 = vmul.f32 %v418, %v381
        %v420 = vadd.f32 %v417, %v419
        %422 = vrot.lane.b32.xlu0 %v420, 83
        %v423 = vpop.permute.xlu0 %422
        %v424 = vrot.slane %v423, 1
        %vm425 = vcmask 678912
        %v426 = vsel %vm425, %v423, %v424
        %v428 = vmul.f32 %v313, %v426
        %v429 = vadd.f32 %v363, %v428
        %s430 = scalar_lea.vmem %s2, 1
        %v431 = vld [vmem:[%s430] ss:$8 sm:$0x3]
        %s432 = sld [smem:[#allocation5 + $0x1]]
        %s433 = sld [smem:[#allocation5 + $0x32]]
        %v434 = vstv %s432
        %v435 = vmul.f32 %v434, %v314
        %v436 = vstv %s433
        %v437 = vmul.f32 %v436, %v315
        %v438 = vadd.f32 %v435, %v437
        %440 = vrot.lane.b32.xlu0 %v438, 50
        %v441 = vpop.permute.xlu0 %440
        %v442 = vrot.slane %v441, 1
        %vm443 = vcmask 408576
        %v444 = vsel %vm443, %v441, %v442
        %v446 = vmul.f32 %v431, %v444
        %v447 = vadd.f32 %v379, %v446
        %s448 = sld [smem:[#allocation5 + $0x8]]
        %s449 = sld [smem:[#allocation5 + $0x39]]
        %v450 = vstv %s448
        %v451 = vmul.f32 %v450, %v314
        %v452 = vstv %s449
        %v453 = vmul.f32 %v452, %v315
        %v454 = vadd.f32 %v451, %v453
        %456 = vrot.lane.b32.xlu0 %v454, 34
        %v457 = vpop.permute.xlu0 %456
        %v458 = vrot.slane %v457, 1
        %vm459 = vcmask 277504
        %v460 = vsel %vm459, %v457, %v458
        %v462 = vmul.f32 %v431, %v460
        %v463 = vadd.f32 %v397, %v462
        %s464 = sld [smem:[#allocation5 + $0xf]]
        %s465 = sld [smem:[#allocation5 + $0x40]]
        %v466 = vstv %s464
        %v467 = vmul.f32 %v466, %v314
        %v468 = vstv %s465
        %v469 = vmul.f32 %v468, %v315
        %v470 = vadd.f32 %v467, %v469
        %472 = vrot.lane.b32.xlu0 %v470, 18
        %v473 = vpop.permute.xlu0 %472
        %v474 = vrot.slane %v473, 1
        %vm475 = vcmask 146432
        %v476 = vsel %vm475, %v473, %v474
        %v478 = vmul.f32 %v431, %v476
        %v479 = vadd.f32 %v413, %v478
        %s480 = sld [smem:[#allocation5 + $0x16]]
        %s481 = sld [smem:[#allocation5 + $0x47]]
        %v482 = vstv %s480
        %v483 = vmul.f32 %v482, %v314
        %v484 = vstv %s481
        %v485 = vmul.f32 %v484, %v315
        %v486 = vadd.f32 %v483, %v485
        %488 = vrot.lane.b32.xlu0 %v486, 2
        %v489 = vpop.permute.xlu0 %488
        %v490 = vrot.slane %v489, 1
        %vm491 = vcmask 15360
        %v492 = vsel %vm491, %v489, %v490
        %v494 = vmul.f32 %v431, %v492
        %v495 = vadd.f32 %v429, %v494
        %s496 = sld [smem:[#allocation5 + $0x1d]]
        %s497 = sld [smem:[#allocation5 + $0x4e]]
        %v498 = vstv %s496
        %v499 = vmul.f32 %v498, %v380
        %v500 = vstv %s497
        %v501 = vmul.f32 %v500, %v381
        %v502 = vadd.f32 %v499, %v501
        %504 = vrot.lane.b32.xlu0 %v502, 114
        %v505 = vpop.permute.xlu0 %504
        %v506 = vrot.slane %v505, 1
        %vm507 = vcmask 932864
        %v508 = vsel %vm507, %v505, %v506
        %v510 = vmul.f32 %v431, %v508
        %v511 = vadd.f32 %v447, %v510
        %s512 = sld [smem:[#allocation5 + $0x24]]
        %s513 = sld [smem:[#allocation5 + $0x55]]
        %v514 = vstv %s512
        %v515 = vmul.f32 %v514, %v380
        %v516 = vstv %s513
        %v517 = vmul.f32 %v516, %v381
        %v518 = vadd.f32 %v515, %v517
        %520 = vrot.lane.b32.xlu0 %v518, 98
        %v521 = vpop.permute.xlu0 %520
        %v522 = vrot.slane %v521, 1
        %vm523 = vcmask 801792
        %v524 = vsel %vm523, %v521, %v522
        %v526 = vmul.f32 %v431, %v524
        %v527 = vadd.f32 %v463, %v526
        %s528 = sld [smem:[#allocation5 + $0x2b]]
        %s529 = sld [smem:[#allocation5 + $0x5c]]
        %v530 = vstv %s528
        %v531 = vmul.f32 %v530, %v380
        %v532 = vstv %s529
        %v533 = vmul.f32 %v532, %v381
        %v534 = vadd.f32 %v531, %v533
        %536 = vrot.lane.b32.xlu0 %v534, 82
        %v537 = vpop.permute.xlu0 %536
        %v538 = vrot.slane %v537, 1
        %vm539 = vcmask 670720
        %v540 = vsel %vm539, %v537, %v538
        %v542 = vmul.f32 %v431, %v540
        %v543 = vadd.f32 %v479, %v542
        %s544 = scalar_lea.vmem %s2, 2
        %v545 = vld [vmem:[%s544] ss:$8 sm:$0x3]
        %s546 = sld [smem:[#allocation5 + $0x2]]
        %s547 = sld [smem:[#allocation5 + $0x33]]
        %v548 = vstv %s546
        %v549 = vmul.f32 %v548, %v314
        %v550 = vstv %s547
        %v551 = vmul.f32 %v550, %v315
        %v552 = vadd.f32 %v549, %v551
        %554 = vrot.lane.b32.xlu0 %v552, 49
        %v555 = vpop.permute.xlu0 %554
        %v556 = vrot.slane %v555, 1
        %vm557 = vcmask 400384
        %v558 = vsel %vm557, %v555, %v556
        %v560 = vmul.f32 %v545, %v558
        %v561 = vadd.f32 %v495, %v560
        %s562 = sld [smem:[#allocation5 + $0x9]]
        %s563 = sld [smem:[#allocation5 + $0x3a]]
        %v564 = vstv %s562
        %v565 = vmul.f32 %v564, %v314
        %v566 = vstv %s563
        %v567 = vmul.f32 %v566, %v315
        %v568 = vadd.f32 %v565, %v567
        %570 = vrot.lane.b32.xlu0 %v568, 33
        %v571 = vpop.permute.xlu0 %570
        %v572 = vrot.slane %v571, 1
        %vm573 = vcmask 269312
        %v574 = vsel %vm573, %v571, %v572
        %v576 = vmul.f32 %v545, %v574
        %v577 = vadd.f32 %v511, %v576
        %s578 = sld [smem:[#allocation5 + $0x10]]
        %s579 = sld [smem:[#allocation5 + $0x41]]
        %v580 = vstv %s578
        %v581 = vmul.f32 %v580, %v314
        %v582 = vstv %s579
        %v583 = vmul.f32 %v582, %v315
        %v584 = vadd.f32 %v581, %v583
        %586 = vrot.lane.b32.xlu0 %v584, 17
        %v587 = vpop.permute.xlu0 %586
        %v588 = vrot.slane %v587, 1
        %vm589 = vcmask 138240
        %v590 = vsel %vm589, %v587, %v588
        %v592 = vmul.f32 %v545, %v590
        %v593 = vadd.f32 %v527, %v592
        %s594 = sld [smem:[#allocation5 + $0x17]]
        %s595 = sld [smem:[#allocation5 + $0x48]]
        %v596 = vstv %s594
        %v597 = vmul.f32 %v596, %v314
        %v598 = vstv %s595
        %v599 = vmul.f32 %v598, %v315
        %v600 = vadd.f32 %v597, %v599
        %602 = vrot.lane.b32.xlu0 %v600, 1
        %v603 = vpop.permute.xlu0 %602
        %v604 = vrot.slane %v603, 1
        %vm605 = vcmask 7168
        %v606 = vsel %vm605, %v603, %v604
        %v608 = vmul.f32 %v545, %v606
        %v609 = vadd.f32 %v543, %v608
        %s610 = sld [smem:[#allocation5 + $0x1e]]
        %s611 = sld [smem:[#allocation5 + $0x4f]]
        %v612 = vstv %s610
        %v613 = vmul.f32 %v612, %v380
        %v614 = vstv %s611
        %v615 = vmul.f32 %v614, %v381
        %v616 = vadd.f32 %v613, %v615
        %618 = vrot.lane.b32.xlu0 %v616, 113
        %v619 = vpop.permute.xlu0 %618
        %v620 = vrot.slane %v619, 1
        %vm621 = vcmask 924672
        %v622 = vsel %vm621, %v619, %v620
        %v624 = vmul.f32 %v545, %v622
        %v625 = vadd.f32 %v561, %v624
        %s626 = sld [smem:[#allocation5 + $0x25]]
        %s627 = sld [smem:[#allocation5 + $0x56]]
        %v628 = vstv %s626
        %v629 = vmul.f32 %v628, %v380
        %v630 = vstv %s627
        %v631 = vmul.f32 %v630, %v381
        %v632 = vadd.f32 %v629, %v631
        %634 = vrot.lane.b32.xlu0 %v632, 97
        %v635 = vpop.permute.xlu0 %634
        %v636 = vrot.slane %v635, 1
        %vm637 = vcmask 793600
        %v638 = vsel %vm637, %v635, %v636
        %v640 = vmul.f32 %v545, %v638
        %v641 = vadd.f32 %v577, %v640
        %s642 = sld [smem:[#allocation5 + $0x2c]]
        %s643 = sld [smem:[#allocation5 + $0x5d]]
        %v644 = vstv %s642
        %v645 = vmul.f32 %v644, %v380
        %v646 = vstv %s643
        %v647 = vmul.f32 %v646, %v381
        %v648 = vadd.f32 %v645, %v647
        %650 = vrot.lane.b32.xlu0 %v648, 81
        %v651 = vpop.permute.xlu0 %650
        %v652 = vrot.slane %v651, 1
        %vm653 = vcmask 662528
        %v654 = vsel %vm653, %v651, %v652
        %v656 = vmul.f32 %v545, %v654
        %v657 = vadd.f32 %v593, %v656
        %s658 = scalar_lea.vmem %s2, 3
        %v659 = vld [vmem:[%s658] ss:$8 sm:$0x3]
        %s660 = sld [smem:[#allocation5 + $0x3]]
        %s661 = sld [smem:[#allocation5 + $0x34]]
        %v662 = vstv %s660
        %v663 = vmul.f32 %v662, %v314
        %v664 = vstv %s661
        %v665 = vmul.f32 %v664, %v315
        %v666 = vadd.f32 %v663, %v665
        %668 = vrot.lane.b32.xlu0 %v666, 48
        %v669 = vpop.permute.xlu0 %668
        %v670 = vrot.slane %v669, 1
        %vm671 = vcmask 392192
        %v672 = vsel %vm671, %v669, %v670
        %v674 = vmul.f32 %v659, %v672
        %v675 = vadd.f32 %v609, %v674
        %s676 = sld [smem:[#allocation5 + $0xa]]
        %s677 = sld [smem:[#allocation5 + $0x3b]]
        %v678 = vstv %s676
        %v679 = vmul.f32 %v678, %v314
        %v680 = vstv %s677
        %v681 = vmul.f32 %v680, %v315
        %v682 = vadd.f32 %v679, %v681
        %684 = vrot.lane.b32.xlu0 %v682, 32
        %v685 = vpop.permute.xlu0 %684
        %v686 = vrot.slane %v685, 1
        %vm687 = vcmask 261120
        %v688 = vsel %vm687, %v685, %v686
        %v690 = vmul.f32 %v659, %v688
        %v691 = vadd.f32 %v625, %v690
        %s692 = sld [smem:[#allocation5 + $0x11]]
        %s693 = sld [smem:[#allocation5 + $0x42]]
        %v694 = vstv %s692
        %v695 = vmul.f32 %v694, %v314
        %v696 = vstv %s693
        %v697 = vmul.f32 %v696, %v315
        %v698 = vadd.f32 %v695, %v697
        %700 = vrot.lane.b32.xlu0 %v698, 16
        %v701 = vpop.permute.xlu0 %700
        %v702 = vrot.slane %v701, 1
        %vm703 = vcmask 130048
        %v704 = vsel %vm703, %v701, %v702
        %v706 = vmul.f32 %v659, %v704
        %v707 = vadd.f32 %v641, %v706
        %v708 = vld [vmem:[#allocation2 + $0x1] sm:$0x3]
        %v709 = vld [vmem:[#allocation3 + $0x1] sm:$0x3]
        %s710 = sld [smem:[#allocation5 + $0x18]]
        %s711 = sld [smem:[#allocation5 + $0x49]]
        %v712 = vstv %s710
        %v713 = vmul.f32 %v712, %v708
        %v714 = vstv %s711
        %v715 = vmul.f32 %v714, %v709
        %v716 = vadd.f32 %v713, %v715
        %v717 = vmul.f32 %v659, %v716
        %v718 = vadd.f32 %v657, %v717
        %s719 = sld [smem:[#allocation5 + $0x1f]]
        %s720 = sld [smem:[#allocation5 + $0x50]]
        %v721 = vstv %s719
        %v722 = vmul.f32 %v721, %v380
        %v723 = vstv %s720
        %v724 = vmul.f32 %v723, %v381
        %v725 = vadd.f32 %v722, %v724
        %727 = vrot.lane.b32.xlu0 %v725, 112
        %v728 = vpop.permute.xlu0 %727
        %v729 = vrot.slane %v728, 1
        %vm730 = vcmask 916480
        %v731 = vsel %vm730, %v728, %v729
        %v733 = vmul.f32 %v659, %v731
        %v734 = vadd.f32 %v675, %v733
        %s735 = sld [smem:[#allocation5 + $0x26]]
        %s736 = sld [smem:[#allocation5 + $0x57]]
        %v737 = vstv %s735
        %v738 = vmul.f32 %v737, %v380
        %v739 = vstv %s736
        %v740 = vmul.f32 %v739, %v381
        %v741 = vadd.f32 %v738, %v740
        %743 = vrot.lane.b32.xlu0 %v741, 96
        %v744 = vpop.permute.xlu0 %743
        %v745 = vrot.slane %v744, 1
        %vm746 = vcmask 785408
        %v747 = vsel %vm746, %v744, %v745
        %v749 = vmul.f32 %v659, %v747
        %v750 = vadd.f32 %v691, %v749
        %s751 = sld [smem:[#allocation5 + $0x2d]]
        %s752 = sld [smem:[#allocation5 + $0x5e]]
        %v753 = vstv %s751
        %v754 = vmul.f32 %v753, %v380
        %v755 = vstv %s752
        %v756 = vmul.f32 %v755, %v381
        %v757 = vadd.f32 %v754, %v756
        %759 = vrot.lane.b32.xlu0 %v757, 80
        %v760 = vpop.permute.xlu0 %759
        %v761 = vrot.slane %v760, 1
        %vm762 = vcmask 654336
        %v763 = vsel %vm762, %v760, %v761
        %v765 = vmul.f32 %v659, %v763
        %v766 = vadd.f32 %v707, %v765
        %s767 = scalar_lea.vmem %s2, 4
        %v768 = vld [vmem:[%s767] ss:$8 sm:$0x3]
        %s769 = sld [smem:[#allocation5 + $0x4]]
        %s770 = sld [smem:[#allocation5 + $0x35]]
        %v771 = vstv %s769
        %v772 = vmul.f32 %v771, %v314
        %v773 = vstv %s770
        %v774 = vmul.f32 %v773, %v315
        %v775 = vadd.f32 %v772, %v774
        %777 = vrot.lane.b32.xlu0 %v775, 47
        %v778 = vpop.permute.xlu0 %777
        %v779 = vrot.slane %v778, 1
        %vm780 = vcmask 384000
        %v781 = vsel %vm780, %v778, %v779
        %v783 = vmul.f32 %v768, %v781
        %v784 = vadd.f32 %v718, %v783
        %s785 = sld [smem:[#allocation5 + $0xb]]
        %s786 = sld [smem:[#allocation5 + $0x3c]]
        %v787 = vstv %s785
        %v788 = vmul.f32 %v787, %v314
        %v789 = vstv %s786
        %v790 = vmul.f32 %v789, %v315
        %v791 = vadd.f32 %v788, %v790
        %793 = vrot.lane.b32.xlu0 %v791, 31
        %v794 = vpop.permute.xlu0 %793
        %v795 = vrot.slane %v794, 1
        %vm796 = vcmask 252928
        %v797 = vsel %vm796, %v794, %v795
        %v799 = vmul.f32 %v768, %v797
        %v800 = vadd.f32 %v734, %v799
        %s801 = sld [smem:[#allocation5 + $0x12]]
        %s802 = sld [smem:[#allocation5 + $0x43]]
        %v803 = vstv %s801
        %v804 = vmul.f32 %v803, %v314
        %v805 = vstv %s802
        %v806 = vmul.f32 %v805, %v315
        %v807 = vadd.f32 %v804, %v806
        %809 = vrot.lane.b32.xlu0 %v807, 15
        %v810 = vpop.permute.xlu0 %809
        %v811 = vrot.slane %v810, 1
        %vm812 = vcmask 121856
        %v813 = vsel %vm812, %v810, %v811
        %v815 = vmul.f32 %v768, %v813
        %v816 = vadd.f32 %v750, %v815
        %s817 = sld [smem:[#allocation5 + $0x19]]
        %s818 = sld [smem:[#allocation5 + $0x4a]]
        %v819 = vstv %s817
        %v820 = vmul.f32 %v819, %v380
        %v821 = vstv %s818
        %v822 = vmul.f32 %v821, %v381
        %v823 = vadd.f32 %v820, %v822
        %825 = vrot.lane.b32.xlu0 %v823, 127
        %v826 = vpop.permute.xlu0 %825
        %v827 = vrot.slane %v826, 1
        %vm828 = vcmask 1039360
        %v829 = vsel %vm828, %v826, %v827
        %v831 = vmul.f32 %v768, %v829
        %v832 = vadd.f32 %v766, %v831
        %s833 = sld [smem:[#allocation5 + $0x20]]
        %s834 = sld [smem:[#allocation5 + $0x51]]
        %v835 = vstv %s833
        %v836 = vmul.f32 %v835, %v380
        %v837 = vstv %s834
        %v838 = vmul.f32 %v837, %v381
        %v839 = vadd.f32 %v836, %v838
        %841 = vrot.lane.b32.xlu0 %v839, 111
        %v842 = vpop.permute.xlu0 %841
        %v843 = vrot.slane %v842, 1
        %vm844 = vcmask 908288
        %v845 = vsel %vm844, %v842, %v843
        %v847 = vmul.f32 %v768, %v845
        %v848 = vadd.f32 %v784, %v847
        %s849 = sld [smem:[#allocation5 + $0x27]]
        %s850 = sld [smem:[#allocation5 + $0x58]]
        %v851 = vstv %s849
        %v852 = vmul.f32 %v851, %v380
        %v853 = vstv %s850
        %v854 = vmul.f32 %v853, %v381
        %v855 = vadd.f32 %v852, %v854
        %857 = vrot.lane.b32.xlu0 %v855, 95
        %v858 = vpop.permute.xlu0 %857
        %v859 = vrot.slane %v858, 1
        %vm860 = vcmask 777216
        %v861 = vsel %vm860, %v858, %v859
        %v863 = vmul.f32 %v768, %v861
        %v864 = vadd.f32 %v800, %v863
        %s865 = sld [smem:[#allocation5 + $0x2e]]
        %s866 = sld [smem:[#allocation5 + $0x5f]]
        %v867 = vstv %s865
        %v868 = vmul.f32 %v867, %v380
        %v869 = vstv %s866
        %v870 = vmul.f32 %v869, %v381
        %v871 = vadd.f32 %v868, %v870
        %873 = vrot.lane.b32.xlu0 %v871, 79
        %v874 = vpop.permute.xlu0 %873
        %v875 = vrot.slane %v874, 1
        %vm876 = vcmask 646144
        %v877 = vsel %vm876, %v874, %v875
        %v879 = vmul.f32 %v768, %v877
        %v880 = vadd.f32 %v816, %v879
        %s881 = scalar_lea.vmem %s2, 5
        %v882 = vld [vmem:[%s881] ss:$8 sm:$0x3]
        %s883 = sld [smem:[#allocation5 + $0x5]]
        %s884 = sld [smem:[#allocation5 + $0x36]]
        %v885 = vstv %s883
        %v886 = vmul.f32 %v885, %v314
        %v887 = vstv %s884
        %v888 = vmul.f32 %v887, %v315
        %v889 = vadd.f32 %v886, %v888
        %891 = vrot.lane.b32.xlu0 %v889, 46
        %v892 = vpop.permute.xlu0 %891
        %v893 = vrot.slane %v892, 1
        %vm894 = vcmask 375808
        %v895 = vsel %vm894, %v892, %v893
        %v897 = vmul.f32 %v882, %v895
        %v898 = vadd.f32 %v832, %v897
        %s899 = sld [smem:[#allocation5 + $0xc]]
        %s900 = sld [smem:[#allocation5 + $0x3d]]
        %v901 = vstv %s899
        %v902 = vmul.f32 %v901, %v314
        %v903 = vstv %s900
        %v904 = vmul.f32 %v903, %v315
        %v905 = vadd.f32 %v902, %v904
        %907 = vrot.lane.b32.xlu0 %v905, 30
        %v908 = vpop.permute.xlu0 %907
        %v909 = vrot.slane %v908, 1
        %vm910 = vcmask 244736
        %v911 = vsel %vm910, %v908, %v909
        %v913 = vmul.f32 %v882, %v911
        %v914 = vadd.f32 %v848, %v913
        %s915 = sld [smem:[#allocation5 + $0x13]]
        %s916 = sld [smem:[#allocation5 + $0x44]]
        %v917 = vstv %s915
        %v918 = vmul.f32 %v917, %v314
        %v919 = vstv %s916
        %v920 = vmul.f32 %v919, %v315
        %v921 = vadd.f32 %v918, %v920
        %923 = vrot.lane.b32.xlu0 %v921, 14
        %v924 = vpop.permute.xlu0 %923
        %v925 = vrot.slane %v924, 1
        %vm926 = vcmask 113664
        %v927 = vsel %vm926, %v924, %v925
        %v929 = vmul.f32 %v882, %v927
        %v930 = vadd.f32 %v864, %v929
        %s931 = sld [smem:[#allocation5 + $0x1a]]
        %s932 = sld [smem:[#allocation5 + $0x4b]]
        %v933 = vstv %s931
        %v934 = vmul.f32 %v933, %v380
        %v935 = vstv %s932
        %v936 = vmul.f32 %v935, %v381
        %v937 = vadd.f32 %v934, %v936
        %939 = vrot.lane.b32.xlu0 %v937, 126
        %v940 = vpop.permute.xlu0 %939
        %v941 = vrot.slane %v940, 1
        %vm942 = vcmask 1031168
        %v943 = vsel %vm942, %v940, %v941
        %v945 = vmul.f32 %v882, %v943
        %v946 = vadd.f32 %v880, %v945
        %s947 = sld [smem:[#allocation5 + $0x21]]
        %s948 = sld [smem:[#allocation5 + $0x52]]
        %v949 = vstv %s947
        %v950 = vmul.f32 %v949, %v380
        %v951 = vstv %s948
        %v952 = vmul.f32 %v951, %v381
        %v953 = vadd.f32 %v950, %v952
        %955 = vrot.lane.b32.xlu0 %v953, 110
        %v956 = vpop.permute.xlu0 %955
        %v957 = vrot.slane %v956, 1
        %vm958 = vcmask 900096
        %v959 = vsel %vm958, %v956, %v957
        %v961 = vmul.f32 %v882, %v959
        %v962 = vadd.f32 %v898, %v961
        %s963 = sld [smem:[#allocation5 + $0x28]]
        %s964 = sld [smem:[#allocation5 + $0x59]]
        %v965 = vstv %s963
        %v966 = vmul.f32 %v965, %v380
        %v967 = vstv %s964
        %v968 = vmul.f32 %v967, %v381
        %v969 = vadd.f32 %v966, %v968
        %971 = vrot.lane.b32.xlu0 %v969, 94
        %v972 = vpop.permute.xlu0 %971
        %v973 = vrot.slane %v972, 1
        %vm974 = vcmask 769024
        %v975 = vsel %vm974, %v972, %v973
        %v977 = vmul.f32 %v882, %v975
        %v978 = vadd.f32 %v914, %v977
        %s979 = sld [smem:[#allocation5 + $0x2f]]
        %s980 = sld [smem:[#allocation5 + $0x60]]
        %v981 = vstv %s979
        %v982 = vmul.f32 %v981, %v380
        %v983 = vstv %s980
        %v984 = vmul.f32 %v983, %v381
        %v985 = vadd.f32 %v982, %v984
        %987 = vrot.lane.b32.xlu0 %v985, 78
        %v988 = vpop.permute.xlu0 %987
        %v989 = vrot.slane %v988, 1
        %vm990 = vcmask 637952
        %v991 = vsel %vm990, %v988, %v989
        %v993 = vmul.f32 %v882, %v991
        %v994 = vadd.f32 %v930, %v993
        %s995 = scalar_lea.vmem %s2, 6
        %v996 = vld [vmem:[%s995] ss:$8 sm:$0x3]
        %s997 = sld [smem:[#allocation5 + $0x6]]
        %s998 = sld [smem:[#allocation5 + $0x37]]
        %v999 = vstv %s997
        %v1000 = vmul.f32 %v999, %v314
        %v1001 = vstv %s998
        %v1002 = vmul.f32 %v1001, %v315
        %v1003 = vadd.f32 %v1000, %v1002
        %1005 = vrot.lane.b32.xlu0 %v1003, 45
        %v1006 = vpop.permute.xlu0 %1005
        %v1007 = vrot.slane %v1006, 1
        %vm1008 = vcmask 367616
        %v1009 = vsel %vm1008, %v1006, %v1007
        %v1011 = vmul.f32 %v996, %v1009
        %v1012 = vadd.f32 %v946, %v1011
        %s1013 = sld [smem:[#allocation5 + $0xd]]
        %s1014 = sld [smem:[#allocation5 + $0x3e]]
        %v1015 = vstv %s1013
        %v1016 = vmul.f32 %v1015, %v314
        %v1017 = vstv %s1014
        %v1018 = vmul.f32 %v1017, %v315
        %v1019 = vadd.f32 %v1016, %v1018
        %1021 = vrot.lane.b32.xlu0 %v1019, 29
        %v1022 = vpop.permute.xlu0 %1021
        %v1023 = vrot.slane %v1022, 1
        %vm1024 = vcmask 236544
        %v1025 = vsel %vm1024, %v1022, %v1023
        %v1027 = vmul.f32 %v996, %v1025
        %v1028 = vadd.f32 %v962, %v1027
        %s1029 = sld [smem:[#allocation5 + $0x14]]
        %s1030 = sld [smem:[#allocation5 + $0x45]]
        %v1031 = vstv %s1029
        %v1032 = vmul.f32 %v1031, %v314
        %v1033 = vstv %s1030
        %v1034 = vmul.f32 %v1033, %v315
        %v1035 = vadd.f32 %v1032, %v1034
        %1037 = vrot.lane.b32.xlu0 %v1035, 13
        %v1038 = vpop.permute.xlu0 %1037
        %v1039 = vrot.slane %v1038, 1
        %vm1040 = vcmask 105472
        %v1041 = vsel %vm1040, %v1038, %v1039
        %v1043 = vmul.f32 %v996, %v1041
        %v1044 = vadd.f32 %v978, %v1043
        %s1045 = sld [smem:[#allocation5 + $0x1b]]
        %s1046 = sld [smem:[#allocation5 + $0x4c]]
        %v1047 = vstv %s1045
        %v1048 = vmul.f32 %v1047, %v380
        %v1049 = vstv %s1046
        %v1050 = vmul.f32 %v1049, %v381
        %v1051 = vadd.f32 %v1048, %v1050
        %1053 = vrot.lane.b32.xlu0 %v1051, 125
        %v1054 = vpop.permute.xlu0 %1053
        %v1055 = vrot.slane %v1054, 1
        %vm1056 = vcmask 1022976
        %v1057 = vsel %vm1056, %v1054, %v1055
        %v1059 = vmul.f32 %v996, %v1057
        %v1060 = vadd.f32 %v994, %v1059
        %s1061 = sld [smem:[#allocation5 + $0x22]]
        %s1062 = sld [smem:[#allocation5 + $0x53]]
        %v1063 = vstv %s1061
        %v1064 = vmul.f32 %v1063, %v380
        %v1065 = vstv %s1062
        %v1066 = vmul.f32 %v1065, %v381
        %v1067 = vadd.f32 %v1064, %v1066
        %1069 = vrot.lane.b32.xlu0 %v1067, 109
        %v1070 = vpop.permute.xlu0 %1069
        %v1071 = vrot.slane %v1070, 1
        %vm1072 = vcmask 891904
        %v1073 = vsel %vm1072, %v1070, %v1071
        %v1075 = vmul.f32 %v996, %v1073
        %v1076 = vadd.f32 %v1012, %v1075
        %s1077 = sld [smem:[#allocation5 + $0x29]]
        %s1078 = sld [smem:[#allocation5 + $0x5a]]
        %v1079 = vstv %s1077
        %v1080 = vmul.f32 %v1079, %v380
        %v1081 = vstv %s1078
        %v1082 = vmul.f32 %v1081, %v381
        %v1083 = vadd.f32 %v1080, %v1082
        %1085 = vrot.lane.b32.xlu0 %v1083, 93
        %v1086 = vpop.permute.xlu0 %1085
        %v1087 = vrot.slane %v1086, 1
        %vm1088 = vcmask 760832
        %v1089 = vsel %vm1088, %v1086, %v1087
        %v1091 = vmul.f32 %v996, %v1089
        %v1092 = vadd.f32 %v1028, %v1091
        %s1093 = sld [smem:[#allocation5 + $0x30]]
        %s1094 = sld [smem:[#allocation5 + $0x61]]
        %v1095 = vstv %s1093
        %v1096 = vmul.f32 %v1095, %v380
        %v1097 = vstv %s1094
        %v1098 = vmul.f32 %v1097, %v381
        %v1099 = vadd.f32 %v1096, %v1098
        %1101 = vrot.lane.b32.xlu0 %v1099, 77
        %v1102 = vpop.permute.xlu0 %1101
        %v1103 = vrot.slane %v1102, 1
        %vm1104 = vcmask 629760
        %v1105 = vsel %vm1104, %v1102, %v1103
        %v1107 = vmul.f32 %v996, %v1105
        %v1108 = vadd.f32 %v1044, %v1107
        %v1109 = vadd.f32 %v1108, %v1060
        %v1110 = vadd.f32 %v1076, %v1092
        %v1111 = vadd.f32 %v1109, %v1110
        %s1112 = sld [smem:[#allocation4]]
        %v1113 = vstv %s1112
        %v1114 = vadd.f32 %v1111, %v1113
        %v1115 = vxor.u32 %v1114, 2147483648
        %v1116 = vmul.f32 %v1115, 1.442695
        %v1117 = vpow.pop %v1116
        %v1118 = vadd.f32 %v1117, 1.0
        %v1119 = vrcp.pop %v1118
        %v1120 = vmul.f32 1.0, %v1119
        %v1121 = vld [vmem:[%s203] sm:$0xff]
        %v1123 = vlaneseq
        %v1124 = vshrl.u32 %v1123, 7
        %v1125 = vsub.s32 0, %v1124
        %v1126 = vrot.slane %v1120, %v1125
        %v1127 = vlaneseq
        %v1128 = vshrl.u32 %v1127, 7
        %v1129 = vsub.s32 1, %v1128
        %v1130 = vrot.slane %v1120, %v1129
        %v1131 = vcombine.low %v1126, %v1130
        %v1133 = vmul.f32 %v1121, %v1131
        %1134 = vst [vmem:[%s228] sm:$0xff] %v1133
        %s1135 = sand.u32 %s120, 1
        %s1136 = scalar_lea.sflag [#allocation7], %s1135
        %s1137 = sand.u32 %s120, 1
        %s1138 = smul.addr %s1137, 8
        %s1139 = scalar_lea.vmem [#allocation10], %s1138
        // Predicated region
        $region45: #{tpu_custom_call.1} parent=35 // pred_check
          %p1140 = pneg %p130
        $region46: #{tpu_custom_call.1} parent=35 // pred_check_branch
          %1142 = sbr.rel (%p1140) target = $region48
        $region47: #{tpu_custom_call.1} parent=35 // pred_region
          %s1144 = ssub.s32 128, 128
          %1145 = vsyncadd %s1136, %s1144
          %s1146 = smul.addr %s23, 2
          %s1147 = smul.addr %s1146, 64
          %s1148 = scalar_lea.hbm %s4, %s1147
          %s1150 = sshll.u32 %s1139, 4
          %s1151 = int_to_ptr.vmem [resolvable:$true] %s1150
          %1153 = dma.vmem_to_hbm [thread:$0]  %s1151, 128, %s1148, %s1136
        $region48: #{tpu_custom_call.1} parent=35 // pred_fallthru
          _
      $region36: #{tpu_custom_call.1} parent=5 // pred_fallthru
        _
      %p1154 = scmp.le.s32.totalorder 2, %s18
      // Predicated region
      $region49: #{tpu_custom_call.1} parent=5 // pred_check
        %p1155 = pneg %p1154
      $region50: #{tpu_custom_call.1} parent=5 // pred_check_branch
        %1157 = sbr.rel (%p1155) target = $region52
      $region51: #{tpu_custom_call.1} parent=5 // pred_region
        %s1158 = ssub.s32 %s18, 2
        // Predicated region
        $region53: #{tpu_custom_call.1} parent=51 // pred_check
          %p1159 = pneg %p136
        $region54: #{tpu_custom_call.1} parent=51 // pred_check_branch
          %1161 = sbr.rel (%p1159) target = $region56
        $region55: #{tpu_custom_call.1} parent=51 // pred_region
          %s1162 = sand.u32 %s121, 1
          %s1163 = scalar_lea.sflag [#allocation7], %s1162
          %s1164 = sand.u32 %s121, 1
          %s1165 = smul.addr %s1164, 8
          %s1166 = scalar_lea.vmem [#allocation10], %s1165
          %1167 = dma.done %s1163, 128
        $region56: #{tpu_custom_call.1} parent=51 // pred_fallthru
          _
      $region52: #{tpu_custom_call.1} parent=5 // pred_fallthru
        _
    $region6: #{tpu_custom_call.1} parent=1 // loop_footer
      %s22 = sadd.s32 1, %s18
    $region7: #{tpu_custom_call.1} parent=1 // loop_footer_branch
      %17 = sbr.rel target = $region3
    $region8: #{tpu_custom_call.1} parent=1 // loop_exit
      _
    %1168 = vsyncpa [#allocation6], 1
    %s1169 = scalar_lea.sflag [#allocation6], 1
    %1170 = vsyncpa %s1169, 1
    %1171 = vsyncpa [#allocation7], 1
    %s1172 = scalar_lea.sflag [#allocation7], 1
    %1173 = vsyncpa %s1172, 1
    %1174 = vsyncpa [#allocation8], 1
    %s1175 = scalar_lea.sflag [#allocation8], 1
    %1176 = vsyncpa %s1175, 1

</llo_original>
